<compile_context>
chip_gen: v7x
topology: tpu7x:2x2x1
jax: 0.10.0
libtpu: 0.0.40
codegen_flags: <defaults>
</compile_context>

<pallas_src>
import math

import jax
import jax.numpy as jnp
from jax.experimental import pallas as pl
from jax.experimental.pallas import tpu as pltpu


# ---------------------------------------------------------------------------
# Model hyper-parameters (consistent with the PyTorch module)
# ---------------------------------------------------------------------------
NUM_CLASSES = 10
GRAPH_DIM = 32
TIME_DIM = 128
HIDDEN = 512

NCGD = NUM_CLASSES + GRAPH_DIM   # 42 real rows of concat([noisy_label, graph_embedding])
IN_PAD = 48                      # 42 -> 48 (sublane multiple); was 128 (trimmed dead rows)
OUT_PAD = 128                    # padded output width (10 -> 128), lane-dense stores

BATCH = 16                       # example batch


# ---------------------------------------------------------------------------
# Pallas kernel: full forward pass for one batch tile
# ---------------------------------------------------------------------------
def diffusion_classifier_kernel(
    t_ref, yg_ref, slab_ref,                  # batch-tiled inputs + packed bias slab
    wt2_ref, w1ab_ref, w1c_ref, w2_ref, w3_ref,
    out_ref,
):
    f32 = jnp.float32
    bf16 = jnp.bfloat16

    # Packed bias/scalar slab: one DMA instead of six tiny ones.
    slab = slab_ref[...]                      # (8, 512) f32
    b1 = slab[0:1, :]                         # (1, 512)
    b2 = slab[1:2, :]                         # (1, 512)
    wt1 = slab[2:3, :TIME_DIM]                # (1, 128)  time_mlp Linear(1,T) weight row
    bt1 = slab[3:4, :TIME_DIM]                # (1, 128)
    bt2 = slab[4:5, :TIME_DIM]                # (1, 128)
    b3 = slab[5:6, :OUT_PAD]                  # (1, 128)  (zero-padded beyond class 10)

    # ---- time_mlp: Linear(1, T) -> ReLU -> Linear(T, T) ----
    # K=1 matmul == broadcast multiply (exact).
    h = jnp.maximum(t_ref[...] * wt1 + bt1, 0.0)                            # (TB, T) f32
    t_emb = (jnp.dot(h.astype(bf16), wt2_ref[...], preferred_element_type=f32)
             + bt2)                                                         # (TB, T) f32

    # ---- Linear(NC+GD+T -> 512) split at the concat boundary ----
    # concat([y, g, t_emb]) @ W1 == [y|g|pad] @ W1ab(48,512) + t_emb @ W1c(128,512)
    x1 = (jnp.dot(yg_ref[...], w1ab_ref[...], preferred_element_type=f32)
          + jnp.dot(t_emb.astype(bf16), w1c_ref[...], preferred_element_type=f32)
          + b1)
    x1 = jnp.maximum(x1, 0.0)

    # ---- Linear(512, 512) -> ReLU ----
    x2 = jnp.maximum(
        jnp.dot(x1.astype(bf16), w2_ref[...], preferred_element_type=f32) + b2,
        0.0)

    # ---- Linear(512, NC) (output padded to 128 lanes) ----
    out_ref[...] = (jnp.dot(x2.astype(bf16), w3_ref[...], preferred_element_type=f32)
                    + b3)


# ---------------------------------------------------------------------------
# Wrapper: padding / layout plumbing + pallas_call
# ---------------------------------------------------------------------------
def _has_two_tensorcores():
    # v7x has 2 TensorCores per chip; feed both via >=2 "parallel" grid steps.
    try:
        kind = jax.devices()[0].device_kind.lower()
        return ("v7" in kind) or ("tpu7" in kind)
    except Exception:
        return False


def diffusion_classifier_forward(noisy_label, graph_embedding, t, params):
    B = noisy_label.shape[0]
    nc, gd, td, hd = NUM_CLASSES, GRAPH_DIM, TIME_DIM, HIDDEN

    # Batch padding: multiple of 16 (bf16 sublane packing). Single full-batch tile by
    # default (no per-step pipeline overhead); TB=512 only for huge batches. On a
    # 2-TC chip, split moderate batches so both cores get a grid step.
    B16 = ((B + 15) // 16) * 16
    if _has_two_tensorcores() and B16 >= 32:
        TB = min(512, ((B16 // 2 + 15) // 16) * 16)
    elif B16 <= 512:
        TB = B16
    else:
        TB = 512
    B_pad = ((B16 + TB - 1) // TB) * TB
    grid = (B_pad // TB,)

    # Fused wrapper prep (one pad each; no .at[].set chains).
    t2d = jnp.pad(t.astype(jnp.float32)[:, None], ((0, B_pad - B), (0, 0)))
    yg = jnp.pad(
        jnp.concatenate([noisy_label, graph_embedding], axis=-1).astype(jnp.float32),
        ((0, B_pad - B), (0, IN_PAD - NCGD)),
    ).astype(jnp.bfloat16)

    args = (
        t2d, yg, params["slab"],
        params["wt2"], params["w1ab"], params["w1c"], params["w2"], params["w3_pad"],
    )

    def bspec(feat):
        return pl.BlockSpec((TB, feat), lambda i: (i, 0))

    def wspec(shape):
        return pl.BlockSpec(shape, lambda i: (0, 0))

    in_specs = [bspec(1), bspec(IN_PAD)] + [wspec(a.shape) for a in args[2:]]
    out_specs = pl.BlockSpec((TB, OUT_PAD), lambda i: (i, 0))

    flops = 2 * B_pad * (td * td + IN_PAD * hd + td * hd + hd * hd + hd * OUT_PAD)
    bytes_accessed = int(sum(a.size * a.dtype.itemsize for a in args)
                         + B_pad * OUT_PAD * 4)

    out = pl.pallas_call(
        diffusion_classifier_kernel,
        out_shape=jax.ShapeDtypeStruct((B_pad, OUT_PAD), jnp.float32),
        grid_spec=pltpu.PrefetchScalarGridSpec(
            num_scalar_prefetch=0,
            grid=grid,
            in_specs=in_specs,
            out_specs=out_specs,
        ),
        compiler_params=pltpu.CompilerParams(
            dimension_semantics=("parallel",),
        ),
        cost_estimate=pl.CostEstimate(
            flops=flops, transcendentals=0, bytes_accessed=bytes_accessed),
    )(*args)

    return out[:B, :nc]


# ---------------------------------------------------------------------------
# Deterministic parameter init (PyTorch nn.Linear default: U(-1/sqrt(fan_in), ...))
# ---------------------------------------------------------------------------
def init_params(key):
    def linear(key, fan_in, fan_out):
        kw, kb = jax.random.split(key)
        bound = 1.0 / math.sqrt(fan_in)
        w = jax.random.uniform(kw, (fan_in, fan_out), jnp.float32, -bound, bound)
        b = jax.random.uniform(kb, (1, fan_out), jnp.float32, -bound, bound)
        return w, b

    keys = jax.random.split(key, 5)
    wt1, bt1 = linear(keys[0], 1, TIME_DIM)
    wt2, bt2 = linear(keys[1], TIME_DIM, TIME_DIM)
    d_in = NUM_CLASSES + GRAPH_DIM + TIME_DIM
    w1, b1 = linear(keys[2], d_in, HIDDEN)
    w2, b2 = linear(keys[3], HIDDEN, HIDDEN)
    w3, b3 = linear(keys[4], HIDDEN, NUM_CLASSES)

    bf16 = jnp.bfloat16
    wt2_bf = wt2.astype(bf16)
    w1_bf = w1.astype(bf16)
    w2_bf = w2.astype(bf16)
    w3_bf = w3.astype(bf16)

    # Kernel-layout tensors: W1 split at the concat boundary; [y|g] part trimmed to
    # 48 K-rows (42 real + 6 zero sublane pad); W3 output-padded to 128 lanes.
    w1ab = jnp.zeros((IN_PAD, HIDDEN), bf16).at[:NCGD].set(w1_bf[:NCGD])
    w1c = w1_bf[NCGD:]                                        # (TIME_DIM, HIDDEN)
    w3_pad = jnp.zeros((HIDDEN, OUT_PAD), bf16).at[:, :NUM_CLASSES].set(w3_bf)

    # All small bias/scalar operands packed into one (8, 512) f32 slab (one DMA).
    slab = jnp.zeros((8, HIDDEN), jnp.float32)
    slab = slab.at[0, :].set(b1[0])
    slab = slab.at[1, :].set(b2[0])
    slab = slab.at[2, :TIME_DIM].set(wt1[0])
    slab = slab.at[3, :TIME_DIM].set(bt1[0])
    slab = slab.at[4, :TIME_DIM].set(bt2[0])
    slab = slab.at[5, :NUM_CLASSES].set(b3[0])

    return {
        # reference layout (bf16 where the kernel uses bf16)
        "wt1": wt1, "bt1": bt1, "wt2": wt2_bf, "bt2": bt2,
        "w1": w1_bf, "b1": b1, "w2": w2_bf, "b2": b2, "w3": w3_bf, "b3": b3,
        # kernel layout
        "w1ab": w1ab, "w1c": w1c, "w3_pad": w3_pad, "slab": slab,
    }


# ---------------------------------------------------------------------------
# Pure-JAX reference (mirrors the PyTorch forward; same bf16 weight quantization)
# ---------------------------------------------------------------------------
def reference_forward(noisy_label, graph_embedding, t, p):
    f32, bf16 = jnp.float32, jnp.bfloat16
    t2d = t.astype(f32).reshape(-1, 1)
    h = jnp.maximum(t2d * p["wt1"] + p["bt1"], 0.0)
    t_emb = jnp.dot(h.astype(bf16), p["wt2"], preferred_element_type=f32) + p["bt2"]
    x = jnp.concatenate([noisy_label, graph_embedding, t_emb], axis=-1)
    x = jnp.maximum(jnp.dot(x.astype(bf16), p["w1"], preferred_element_type=f32) + p["b1"], 0.0)
    x = jnp.maximum(jnp.dot(x.astype(bf16), p["w2"], preferred_element_type=f32) + p["b2"], 0.0)
    return jnp.dot(x.astype(bf16), p["w3"], preferred_element_type=f32) + p["b3"]


if __name__ == "__main__":
    key = jax.random.PRNGKey(0)
    kp, k1, k2, k3 = jax.random.split(key, 4)

    params = init_params(kp)
    noisy_label = jax.random.normal(k1, (BATCH, NUM_CLASSES), jnp.float32)
    graph_embedding = jax.random.normal(k2, (BATCH, GRAPH_DIM), jnp.float32)
    t = jax.random.randint(k3, (BATCH,), 0, 1000).astype(jnp.float32)

    fwd = jax.jit(diffusion_classifier_forward)
    out = fwd(noisy_label, graph_embedding, t, params)
    out = jax.block_until_ready(out)
    assert out.shape == (BATCH, NUM_CLASSES)

    ref = reference_forward(noisy_label, graph_embedding, t, params)
    rel_err = float(jnp.max(jnp.abs(out - ref)) / (jnp.max(jnp.abs(ref)) + 1e-6))
    assert rel_err < 1e-2, f"mismatch vs reference: rel_err={rel_err}"

    print("KERNEL_OK")
</pallas_src>

<mosaic_0001>
module attributes {stable_mosaic.version = 11 : i64} {
  func.func @diffusion_classifier_kernel(%arg0: i32, %arg1: memref<16x1xf32, #tpu.memory_space<vmem>>, %arg2: memref<16x48xbf16, #tpu.memory_space<vmem>>, %arg3: memref<8x512xf32, #tpu.memory_space<vmem>>, %arg4: memref<128x128xbf16, #tpu.memory_space<vmem>>, %arg5: memref<48x512xbf16, #tpu.memory_space<vmem>>, %arg6: memref<128x512xbf16, #tpu.memory_space<vmem>>, %arg7: memref<512x512xbf16, #tpu.memory_space<vmem>>, %arg8: memref<512x128xbf16, #tpu.memory_space<vmem>>, %arg9: memref<16x128xf32, #tpu.memory_space<vmem>>) attributes {dimension_semantics = [#tpu.dimension_semantics<parallel>], iteration_bounds = array<i64: 1>, scalar_prefetch = 0 : i64, scratch_operands = 0 : i64, tpu.core_type = #tpu.core_type<tc>, window_params = [{transform_indices = @transform_0, window_bounds = array<i64: 16, 1>}, {transform_indices = @transform_1, window_bounds = array<i64: 16, 48>}, {pipeline_mode = #tpu.pipeline_mode<synchronous>, transform_indices = @transform_2, window_bounds = array<i64: 8, 512>}, {pipeline_mode = #tpu.pipeline_mode<synchronous>, transform_indices = @transform_3, window_bounds = array<i64: 128, 128>}, {pipeline_mode = #tpu.pipeline_mode<synchronous>, transform_indices = @transform_4, window_bounds = array<i64: 48, 512>}, {pipeline_mode = #tpu.pipeline_mode<synchronous>, transform_indices = @transform_5, window_bounds = array<i64: 128, 512>}, {pipeline_mode = #tpu.pipeline_mode<synchronous>, transform_indices = @transform_6, window_bounds = array<i64: 512, 512>}, {pipeline_mode = #tpu.pipeline_mode<synchronous>, transform_indices = @transform_7, window_bounds = array<i64: 512, 128>}, {transform_indices = @transform_8, window_bounds = array<i64: 16, 128>}]} {
    %c0 = arith.constant 0 : index
    %c0_0 = arith.constant 0 : index
    %0 = vector.load %arg3[%c0, %c0_0] : memref<8x512xf32, #tpu.memory_space<vmem>>, vector<8x512xf32>
    %1 = vector.extract_strided_slice %0 {offsets = [0, 0], sizes = [1, 512], strides = [1, 1]} : vector<8x512xf32> to vector<1x512xf32>
    %2 = vector.extract_strided_slice %0 {offsets = [1, 0], sizes = [1, 512], strides = [1, 1]} : vector<8x512xf32> to vector<1x512xf32>
    %3 = vector.extract_strided_slice %0 {offsets = [2, 0], sizes = [1, 128], strides = [1, 1]} : vector<8x512xf32> to vector<1x128xf32>
    %4 = vector.extract_strided_slice %0 {offsets = [3, 0], sizes = [1, 128], strides = [1, 1]} : vector<8x512xf32> to vector<1x128xf32>
    %5 = vector.extract_strided_slice %0 {offsets = [4, 0], sizes = [1, 128], strides = [1, 1]} : vector<8x512xf32> to vector<1x128xf32>
    %6 = vector.extract_strided_slice %0 {offsets = [5, 0], sizes = [1, 128], strides = [1, 1]} : vector<8x512xf32> to vector<1x128xf32>
    %c0_1 = arith.constant 0 : index
    %c0_2 = arith.constant 0 : index
    %7 = vector.load %arg1[%c0_1, %c0_2] : memref<16x1xf32, #tpu.memory_space<vmem>>, vector<16x1xf32>
    %8 = vector.broadcast %7 : vector<16x1xf32> to vector<16x128xf32>
    %9 = vector.broadcast %3 : vector<1x128xf32> to vector<16x128xf32>
    %10 = arith.mulf %8, %9 : vector<16x128xf32>
    %11 = vector.broadcast %4 : vector<1x128xf32> to vector<16x128xf32>
    %12 = arith.addf %10, %11 : vector<16x128xf32>
    %cst = arith.constant 0.000000e+00 : f32
    %13 = vector.broadcast %cst : f32 to vector<16x128xf32>
    %14 = arith.maximumf %12, %13 : vector<16x128xf32>
    %15 = arith.truncf %14 : vector<16x128xf32> to vector<16x128xbf16>
    %c0_3 = arith.constant 0 : index
    %c0_4 = arith.constant 0 : index
    %16 = vector.load %arg4[%c0_3, %c0_4] : memref<128x128xbf16, #tpu.memory_space<vmem>>, vector<128x128xbf16>
    %cst_5 = arith.constant dense<0.000000e+00> : vector<16x128xf32>
    %17 = tpu.matmul %15, %16, %cst_5 {dimension_numbers = #tpu.dot_dimension_numbers<[1], [0], [0], [1], [0, 0, 1, 1], [], []>} : vector<16x128xbf16>, vector<128x128xbf16>, vector<16x128xf32> -> vector<16x128xf32>
    %18 = vector.broadcast %5 : vector<1x128xf32> to vector<16x128xf32>
    %19 = arith.addf %17, %18 : vector<16x128xf32>
    %c0_6 = arith.constant 0 : index
    %c0_7 = arith.constant 0 : index
    %20 = vector.load %arg2[%c0_6, %c0_7] : memref<16x48xbf16, #tpu.memory_space<vmem>>, vector<16x48xbf16>
    %c0_8 = arith.constant 0 : index
    %c0_9 = arith.constant 0 : index
    %21 = vector.load %arg5[%c0_8, %c0_9] : memref<48x512xbf16, #tpu.memory_space<vmem>>, vector<48x512xbf16>
    %cst_10 = arith.constant dense<0.000000e+00> : vector<16x512xf32>
    %22 = tpu.matmul %20, %21, %cst_10 {dimension_numbers = #tpu.dot_dimension_numbers<[1], [0], [0], [1], [0, 0, 1, 1], [], []>} : vector<16x48xbf16>, vector<48x512xbf16>, vector<16x512xf32> -> vector<16x512xf32>
    %23 = arith.truncf %19 : vector<16x128xf32> to vector<16x128xbf16>
    %c0_11 = arith.constant 0 : index
    %c0_12 = arith.constant 0 : index
    %24 = vector.load %arg6[%c0_11, %c0_12] : memref<128x512xbf16, #tpu.memory_space<vmem>>, vector<128x512xbf16>
    %cst_13 = arith.constant dense<0.000000e+00> : vector<16x512xf32>
    %25 = tpu.matmul %23, %24, %cst_13 {dimension_numbers = #tpu.dot_dimension_numbers<[1], [0], [0], [1], [0, 0, 1, 1], [], []>} : vector<16x128xbf16>, vector<128x512xbf16>, vector<16x512xf32> -> vector<16x512xf32>
    %26 = arith.addf %22, %25 : vector<16x512xf32>
    %27 = vector.broadcast %1 : vector<1x512xf32> to vector<16x512xf32>
    %28 = arith.addf %26, %27 : vector<16x512xf32>
    %cst_14 = arith.constant 0.000000e+00 : f32
    %29 = vector.broadcast %cst_14 : f32 to vector<16x512xf32>
    %30 = arith.maximumf %28, %29 : vector<16x512xf32>
    %31 = arith.truncf %30 : vector<16x512xf32> to vector<16x512xbf16>
    %c0_15 = arith.constant 0 : index
    %c0_16 = arith.constant 0 : index
    %32 = vector.load %arg7[%c0_15, %c0_16] : memref<512x512xbf16, #tpu.memory_space<vmem>>, vector<512x512xbf16>
    %cst_17 = arith.constant dense<0.000000e+00> : vector<16x512xf32>
    %33 = tpu.matmul %31, %32, %cst_17 {dimension_numbers = #tpu.dot_dimension_numbers<[1], [0], [0], [1], [0, 0, 1, 1], [], []>} : vector<16x512xbf16>, vector<512x512xbf16>, vector<16x512xf32> -> vector<16x512xf32>
    %34 = vector.broadcast %2 : vector<1x512xf32> to vector<16x512xf32>
    %35 = arith.addf %33, %34 : vector<16x512xf32>
    %cst_18 = arith.constant 0.000000e+00 : f32
    %36 = vector.broadcast %cst_18 : f32 to vector<16x512xf32>
    %37 = arith.maximumf %35, %36 : vector<16x512xf32>
    %38 = arith.truncf %37 : vector<16x512xf32> to vector<16x512xbf16>
    %c0_19 = arith.constant 0 : index
    %c0_20 = arith.constant 0 : index
    %39 = vector.load %arg8[%c0_19, %c0_20] : memref<512x128xbf16, #tpu.memory_space<vmem>>, vector<512x128xbf16>
    %cst_21 = arith.constant dense<0.000000e+00> : vector<16x128xf32>
    %40 = tpu.matmul %38, %39, %cst_21 {dimension_numbers = #tpu.dot_dimension_numbers<[1], [0], [0], [1], [0, 0, 1, 1], [], []>} : vector<16x512xbf16>, vector<512x128xbf16>, vector<16x128xf32> -> vector<16x128xf32>
    %41 = vector.broadcast %6 : vector<1x128xf32> to vector<16x128xf32>
    %42 = arith.addf %40, %41 : vector<16x128xf32>
    %c0_22 = arith.constant 0 : index
    %c0_23 = arith.constant 0 : index
    %43 = vector.load %arg9[%c0_22, %c0_23] : memref<16x128xf32, #tpu.memory_space<vmem>>, vector<16x128xf32>
    tpu.vector_store %arg9[%c0_22, %c0_23], %42 {strides = array<i32>} : memref<16x128xf32, #tpu.memory_space<vmem>>, vector<16x128xf32>,
    return
  }
  func.func @transform_0(%arg0: i32) -> (i32, i32) {
    %c0_i32 = arith.constant 0 : i32
    %c0_i32_0 = arith.constant 0 : i32
    return %arg0, %c0_i32 : i32, i32
  }
  func.func @transform_1(%arg0: i32) -> (i32, i32) {
    %c0_i32 = arith.constant 0 : i32
    %c0_i32_0 = arith.constant 0 : i32
    return %arg0, %c0_i32 : i32, i32
  }
  func.func @transform_2(%arg0: i32) -> (i32, i32) {
    %c0_i32 = arith.constant 0 : i32
    %c0_i32_0 = arith.constant 0 : i32
    %c0_i32_1 = arith.constant 0 : i32
    return %c0_i32, %c0_i32_0 : i32, i32
  }
  func.func @transform_3(%arg0: i32) -> (i32, i32) {
    %c0_i32 = arith.constant 0 : i32
    %c0_i32_0 = arith.constant 0 : i32
    %c0_i32_1 = arith.constant 0 : i32
    return %c0_i32, %c0_i32_0 : i32, i32
  }
  func.func @transform_4(%arg0: i32) -> (i32, i32) {
    %c0_i32 = arith.constant 0 : i32
    %c0_i32_0 = arith.constant 0 : i32
    %c0_i32_1 = arith.constant 0 : i32
    return %c0_i32, %c0_i32_0 : i32, i32
  }
  func.func @transform_5(%arg0: i32) -> (i32, i32) {
    %c0_i32 = arith.constant 0 : i32
    %c0_i32_0 = arith.constant 0 : i32
    %c0_i32_1 = arith.constant 0 : i32
    return %c0_i32, %c0_i32_0 : i32, i32
  }
  func.func @transform_6(%arg0: i32) -> (i32, i32) {
    %c0_i32 = arith.constant 0 : i32
    %c0_i32_0 = arith.constant 0 : i32
    %c0_i32_1 = arith.constant 0 : i32
    return %c0_i32, %c0_i32_0 : i32, i32
  }
  func.func @transform_7(%arg0: i32) -> (i32, i32) {
    %c0_i32 = arith.constant 0 : i32
    %c0_i32_0 = arith.constant 0 : i32
    %c0_i32_1 = arith.constant 0 : i32
    return %c0_i32, %c0_i32_0 : i32, i32
  }
  func.func @transform_8(%arg0: i32) -> (i32, i32) {
    %c0_i32 = arith.constant 0 : i32
    %c0_i32_0 = arith.constant 0 : i32
    return %arg0, %c0_i32 : i32, i32
  }
}

</mosaic_0001>

<llo_original>
// kernel: diffusion_classifier_forward.1
$region0: #{diffusion_classifier_forward.1}
  #allocation0 [shape = 'u32[]', space=smem, size = 0x4, offset = 0x4, fixed_abs, tag = 'smem constant byte address 0x4 - core index']
  #allocation1 [shape = 'u32[144,128]{1,0:T(1,128)}', space=vmem, size = 0x12000, scoped, tag = 'internal scratch']
  %s0 = inlined_call_operand.vmem [shape: f32[16,1], index: 0, kind: input, shape index: {}]
  %s1 = inlined_call_operand.vmem [shape: bf16[16,48], index: 1, kind: input, shape index: {}]
  %s2 = inlined_call_operand.hbm [shape: f32[8,512], index: 2, kind: input, shape index: {}]
  %s3 = inlined_call_operand.hbm [shape: bf16[128,128], index: 3, kind: input, shape index: {}]
  %s4 = inlined_call_operand.vmem [shape: bf16[48,512], index: 4, kind: input, shape index: {}]
  %s5 = inlined_call_operand.hbm [shape: bf16[128,512], index: 5, kind: input, shape index: {}]
  %s6 = inlined_call_operand.hbm [shape: bf16[512,512], index: 6, kind: input, shape index: {}]
  %s7 = inlined_call_operand.hbm [shape: bf16[512,128], index: 7, kind: input, shape index: {}]
  %s8 = inlined_call_operand.hbm [shape: f32[16,128], index: 8, kind: output, shape index: {}]
  %s9 = sld [smem:[#allocation0]]
  $region62: #{diffusion_classifier_forward.1} parent=0
    _
  %s11 = ssub.s32 1, %s9
  %s12 = scalar_select 0, %s11, %s9
  $region1: #{diffusion_classifier_forward.1} parent=0
    #allocation2 [shape = 'u8[16384]{0}', space=vmem, size = 0x4000, scoped, tag = 'input window, operand 2, single buffered']
    #allocation3 [shape = 's32[1]{0}', space=sflag, size = 0x4, scoped, tag = 'scoped memory for diffusion_classifier_forward.1']
    #allocation4 [shape = 's32[1]{0}', space=sflag, size = 0x4, scoped, tag = 'scoped memory for diffusion_classifier_forward.1']
    #allocation5 [shape = 'u8[32768]{0}', space=vmem, size = 0x8000, scoped, tag = 'input window, operand 3, single buffered']
    #allocation6 [shape = 's32[1]{0}', space=sflag, size = 0x4, scoped, tag = 'scoped memory for diffusion_classifier_forward.1']
    #allocation7 [shape = 'u8[131072]{0}', space=vmem, size = 0x20000, scoped, tag = 'input window, operand 5, single buffered']
    #allocation8 [shape = 'u8[524288]{0}', space=vmem, size = 0x80000, scoped, tag = 'input window, operand 6, single buffered']
    #allocation9 [shape = 's32[1]{0}', space=sflag, size = 0x4, scoped, tag = 'scoped memory for diffusion_classifier_forward.1']
    #allocation10 [shape = 'u8[131072]{0}', space=vmem, size = 0x20000, scoped, tag = 'input window, operand 7, single buffered']
    #allocation11 [shape = 'u8[8192]{0}', space=vmem, size = 0x2000, scoped, tag = 'output window, operand 0, single buffered']
    %13 = vsyncpa [#allocation3], 0
    %14 = vsyncpa [#allocation6], 0
    %15 = vsyncpa [#allocation9], 0
    %16 = vsyncpa [#allocation4], 0
    // Predicated region
    $region2: #{diffusion_classifier_forward.1} parent=1 // pred_check
      _
    $region3: #{diffusion_classifier_forward.1} parent=1 // pred_check_branch
      %18 = sbr.rel (0) target = $region5
    $region4: #{diffusion_classifier_forward.1} parent=1 // pred_region
      _
    $region5: #{diffusion_classifier_forward.1} parent=1 // pred_fallthru
      _
    // Predicated region
    $region6: #{diffusion_classifier_forward.1} parent=1 // pred_check
      _
    $region7: #{diffusion_classifier_forward.1} parent=1 // pred_check_branch
      %20 = sbr.rel (0) target = $region9
    $region8: #{diffusion_classifier_forward.1} parent=1 // pred_region
      _
    $region9: #{diffusion_classifier_forward.1} parent=1 // pred_fallthru
      _
    // Predicated region
    $region10: #{diffusion_classifier_forward.1} parent=1 // pred_check
      _
    $region11: #{diffusion_classifier_forward.1} parent=1 // pred_check_branch
      %22 = sbr.rel (0) target = $region13
    $region12: #{diffusion_classifier_forward.1} parent=1 // pred_region
      %s24 = ssub.s32 512, 512
      %25 = vsyncadd [#allocation3], %s24
      %s27 = sshll.u32 [#allocation2], 4
      %s28 = int_to_ptr.vmem [resolvable:$true] %s27
      %30 = dma.hbm_to_vmem [thread:$0]  %s2, 512, %s28, [#allocation3]
    $region13: #{diffusion_classifier_forward.1} parent=1 // pred_fallthru
      _
    // Predicated region
    $region14: #{diffusion_classifier_forward.1} parent=1 // pred_check
      _
    $region15: #{diffusion_classifier_forward.1} parent=1 // pred_check_branch
      %32 = sbr.rel (0) target = $region17
    $region16: #{diffusion_classifier_forward.1} parent=1 // pred_region
      %s34 = ssub.s32 1024, 1024
      %35 = vsyncadd [#allocation6], %s34
      %s36 = sshll.u32 [#allocation5], 4
      %s37 = int_to_ptr.vmem [resolvable:$true] %s36
      %42 = dma.hbm_to_vmem [thread:$0]  %s3, 1024, %s37, [#allocation6], 64, 64, 4
    $region17: #{diffusion_classifier_forward.1} parent=1 // pred_fallthru
      _
    // Predicated region
    $region18: #{diffusion_classifier_forward.1} parent=1 // pred_check
      _
    $region19: #{diffusion_classifier_forward.1} parent=1 // pred_check_branch
      %44 = sbr.rel (0) target = $region21
    $region20: #{diffusion_classifier_forward.1} parent=1 // pred_region
      _
    $region21: #{diffusion_classifier_forward.1} parent=1 // pred_fallthru
      _
    // Predicated region
    $region22: #{diffusion_classifier_forward.1} parent=1 // pred_check
      _
    $region23: #{diffusion_classifier_forward.1} parent=1 // pred_check_branch
      %46 = sbr.rel (0) target = $region25
    $region24: #{diffusion_classifier_forward.1} parent=1 // pred_region
      %s48 = ssub.s32 4096, 4096
      %49 = vsyncadd [#allocation6], %s48
      %s50 = sshll.u32 [#allocation7], 4
      %s51 = int_to_ptr.vmem [resolvable:$true] %s50
      %56 = dma.hbm_to_vmem [thread:$0]  %s5, 4096, %s51, [#allocation6], 256, 256, 16
    $region25: #{diffusion_classifier_forward.1} parent=1 // pred_fallthru
      _
    // Predicated region
    $region26: #{diffusion_classifier_forward.1} parent=1 // pred_check
      _
    $region27: #{diffusion_classifier_forward.1} parent=1 // pred_check_branch
      %58 = sbr.rel (0) target = $region29
    $region28: #{diffusion_classifier_forward.1} parent=1 // pred_region
      %s60 = ssub.s32 16384, 16384
      %61 = vsyncadd [#allocation9], %s60
      %s62 = sshll.u32 [#allocation8], 4
      %s63 = int_to_ptr.vmem [resolvable:$true] %s62
      %68 = dma.hbm_to_vmem [thread:$0]  %s6, 16384, %s63, [#allocation9], 256, 256, 16
    $region29: #{diffusion_classifier_forward.1} parent=1 // pred_fallthru
      _
    // Predicated region
    $region30: #{diffusion_classifier_forward.1} parent=1 // pred_check
      _
    $region31: #{diffusion_classifier_forward.1} parent=1 // pred_check_branch
      %70 = sbr.rel (0) target = $region33
    $region32: #{diffusion_classifier_forward.1} parent=1 // pred_region
      %s72 = ssub.s32 4096, 4096
      %73 = vsyncadd [#allocation9], %s72
      %s74 = sshll.u32 [#allocation10], 4
      %s75 = int_to_ptr.vmem [resolvable:$true] %s74
      %80 = dma.hbm_to_vmem [thread:$0]  %s7, 4096, %s75, [#allocation9], 64, 64, 4
    $region33: #{diffusion_classifier_forward.1} parent=1 // pred_fallthru
      _
    // Predicated region
    $region34: #{diffusion_classifier_forward.1} parent=1 // pred_check
      _
    $region35: #{diffusion_classifier_forward.1} parent=1 // pred_check_branch
      %82 = sbr.rel (0) target = $region37
    $region36: #{diffusion_classifier_forward.1} parent=1 // pred_region
      %83 = dma.done [#allocation3], 512
    $region37: #{diffusion_classifier_forward.1} parent=1 // pred_fallthru
      _
    // Predicated region
    $region38: #{diffusion_classifier_forward.1} parent=1 // pred_check
      _
    $region39: #{diffusion_classifier_forward.1} parent=1 // pred_check_branch
      %85 = sbr.rel (0) target = $region41
    $region40: #{diffusion_classifier_forward.1} parent=1 // pred_region
      %86 = dma.done [#allocation6], 1024
    $region41: #{diffusion_classifier_forward.1} parent=1 // pred_fallthru
      _
    // Predicated region
    $region42: #{diffusion_classifier_forward.1} parent=1 // pred_check
      _
    $region43: #{diffusion_classifier_forward.1} parent=1 // pred_check_branch
      %88 = sbr.rel (0) target = $region45
    $region44: #{diffusion_classifier_forward.1} parent=1 // pred_region
      %89 = dma.done [#allocation6], 4096
    $region45: #{diffusion_classifier_forward.1} parent=1 // pred_fallthru
      _
    // Predicated region
    $region46: #{diffusion_classifier_forward.1} parent=1 // pred_check
      _
    $region47: #{diffusion_classifier_forward.1} parent=1 // pred_check_branch
      %91 = sbr.rel (0) target = $region49
    $region48: #{diffusion_classifier_forward.1} parent=1 // pred_region
      %92 = dma.done [#allocation9], 16384
    $region49: #{diffusion_classifier_forward.1} parent=1 // pred_fallthru
      _
    // Predicated region
    $region50: #{diffusion_classifier_forward.1} parent=1 // pred_check
      _
    $region51: #{diffusion_classifier_forward.1} parent=1 // pred_check_branch
      %94 = sbr.rel (0) target = $region53
    $region52: #{diffusion_classifier_forward.1} parent=1 // pred_region
      %95 = dma.done [#allocation9], 4096
    $region53: #{diffusion_classifier_forward.1} parent=1 // pred_fallthru
      _
    %v97 = vld [vmem:[#allocation2] sm:$0xff]
    %v98 = vld [vmem:[#allocation2 + $0x8] sm:$0xff]
    %v99 = vld [vmem:[#allocation2 + $0x10] sm:$0xff]
    %v100 = vld [vmem:[#allocation2 + $0x18] sm:$0xff]
    %v101 = vld [vmem:[%s0] sm:$0xff]
    %v102 = vld [vmem:[%s0 + $0x8] sm:$0xff]
    %104 = vset.pattern.permute.xlu0 0
    %105 = vperm.xlu0 %104, %v101
    %v106 = vpop.permute.xlu0 %105
    %109 = vset.pattern.permute.xlu0 0
    %110 = vperm.xlu0 %109, %v102
    %v111 = vpop.permute.xlu0 %110
    %v113 = vlaneseq
    %v114 = vshrl.u32 %v113, 7
    %v115 = vsub.s32 2, %v114
    %v116 = vrot.slane %v97, %v115
    %v117 = vmul.f32 %v106, %v116
    %v118 = vmul.f32 %v111, %v116
    %v119 = vlaneseq
    %v120 = vshrl.u32 %v119, 7
    %v121 = vsub.s32 3, %v120
    %v122 = vrot.slane %v97, %v121
    %v123 = vadd.f32 %v117, %v122
    %v124 = vadd.f32 %v118, %v122
    %v125 = vmax.f32 %v123, 0.0
    %v126 = vmax.f32 %v124, 0.0
    %v127 = vpack.c.bf16 %v126, %v125
    %v128 = vld [vmem:[#allocation5] sm:$0xf]
    %v129 = vld [vmem:[#allocation5 + $0x4] sm:$0xf]
    %v130 = vld [vmem:[#allocation5 + $0x8] sm:$0xf]
    %v131 = vld [vmem:[#allocation5 + $0xc] sm:$0xf]
    %v132 = vld [vmem:[#allocation5 + $0x10] sm:$0xf]
    %v133 = vld [vmem:[#allocation5 + $0x14] sm:$0xf]
    %v134 = vld [vmem:[#allocation5 + $0x18] sm:$0xf]
    %v135 = vld [vmem:[#allocation5 + $0x1c] sm:$0xf]
    %v136 = vld [vmem:[#allocation5 + $0x20] sm:$0xf]
    %v137 = vld [vmem:[#allocation5 + $0x24] sm:$0xf]
    %v138 = vld [vmem:[#allocation5 + $0x28] sm:$0xf]
    %v139 = vld [vmem:[#allocation5 + $0x2c] sm:$0xf]
    %v140 = vld [vmem:[#allocation5 + $0x30] sm:$0xf]
    %v141 = vld [vmem:[#allocation5 + $0x34] sm:$0xf]
    %v142 = vld [vmem:[#allocation5 + $0x38] sm:$0xf]
    %v143 = vld [vmem:[#allocation5 + $0x3c] sm:$0xf]
    %v144 = vlaneseq
    %v145 = vshrl.u32 %v144, 7
    %v146 = vsub.s32 4, %v145
    %v147 = vrot.slane %v97, %v146
    %v164 = vunpack.c.l.b16 %v128
    %v165 = vunpack.c.l.b16 %v129
    %v166 = vunpack.c.l.b16 %v130
    %v167 = vunpack.c.l.b16 %v131
    %v168 = vunpack.c.l.b16 %v132
    %v169 = vunpack.c.l.b16 %v133
    %v170 = vunpack.c.l.b16 %v134
    %v171 = vunpack.c.l.b16 %v135
    %v172 = vunpack.c.l.b16 %v136
    %v173 = vunpack.c.l.b16 %v137
    %v174 = vunpack.c.l.b16 %v138
    %v175 = vunpack.c.l.b16 %v139
    %v176 = vunpack.c.l.b16 %v140
    %v177 = vunpack.c.l.b16 %v141
    %v178 = vunpack.c.l.b16 %v142
    %v179 = vunpack.c.l.b16 %v143
    %v180 = vpack.c.b16 %v165, %v164
    %v181 = vpack.c.b16 %v167, %v166
    %v182 = vpack.c.b16 %v169, %v168
    %v183 = vpack.c.b16 %v171, %v170
    %v184 = vpack.c.b16 %v173, %v172
    %v185 = vpack.c.b16 %v175, %v174
    %v186 = vpack.c.b16 %v177, %v176
    %v187 = vpack.c.b16 %v179, %v178
    %196 = vmatprep.subr.bf16.mxu0 0
    %197 = vmatpush1.bf16.msra.mxu0 %v180
    %198 = vmatprep.subr.bf16.mxu0 0
    %199 = vmatpush1.bf16.msra.mxu0 %v181
    %200 = vmatprep.subr.bf16.mxu0 0
    %201 = vmatpush1.bf16.msra.mxu0 %v182
    %202 = vmatprep.subr.bf16.mxu0 0
    %203 = vmatpush1.bf16.msra.mxu0 %v183
    %204 = vmatprep.subr.bf16.mxu0 0
    %205 = vmatpush1.bf16.msra.mxu0 %v184
    %206 = vmatprep.subr.bf16.mxu0 0
    %207 = vmatpush1.bf16.msra.mxu0 %v185
    %208 = vmatprep.subr.bf16.mxu0 0
    %209 = vmatpush1.bf16.msra.mxu0 %v186
    %210 = vmatprep.subr.bf16.mxu0 0
    %211 = vmatpush1.bf16.msra.mxu0 %v187
    %212 = vmatprep.subr.bf16.mxu0 0
    %213 = vmatpush1.bf16.msra.mxu0 0
    %214 = vmatprep.subr.bf16.mxu0 0
    %215 = vmatpush1.bf16.msra.mxu0 0
    %216 = vmatprep.subr.bf16.mxu0 0
    %217 = vmatpush1.bf16.msra.mxu0 0
    %218 = vmatprep.subr.bf16.mxu0 0
    %219 = vmatpush1.bf16.msra.mxu0 0
    %220 = vmatprep.subr.bf16.mxu0 0
    %221 = vmatpush1.bf16.msra.mxu0 0
    %222 = vmatprep.subr.bf16.mxu0 0
    %223 = vmatpush1.bf16.msra.mxu0 0
    %224 = vmatprep.subr.bf16.mxu0 0
    %225 = vmatpush1.bf16.msra.mxu0 0
    %226 = vmatprep.subr.bf16.mxu0 0
    %227 = vmatpush1.bf16.msra.mxu0 0
    %228 = vmatprep.mubr.bf16.mxu0 0
    %229 = vmatmul.mubr.bf16.gmra.mrb[0].mxu0 %v127
    %v230 = vpop.f32.mrb[0].mxu0
    %v231 = vadd.f32 %v147, %v230
    %v232 = vpop.f32.mrb[0].mxu0
    %v233 = vpop.f32.mrb[0].mxu0
    %v234 = vadd.f32 %v147, %v233
    %v235 = vpop.f32.mrb[0].mxu0
    %236 = vdwg.mxu0
    %v237 = vld [vmem:[%s1] sm:$0xf]
    %v238 = vld [vmem:[%s1 + $0x4] sm:$0xf]
    %v239 = vld [vmem:[%s4] sm:$0xff]
    %v240 = vld [vmem:[%s4 + $0x8] sm:$0xff]
    %v241 = vld [vmem:[%s4 + $0x10] sm:$0xff]
    %v242 = vld [vmem:[%s4 + $0x18] sm:$0xff]
    %v243 = vld [vmem:[%s4 + $0x20] sm:$0xff]
    %v244 = vld [vmem:[%s4 + $0x28] sm:$0xff]
    %v245 = vld [vmem:[%s4 + $0x30] sm:$0xff]
    %v246 = vld [vmem:[%s4 + $0x38] sm:$0xff]
    %v247 = vld [vmem:[%s4 + $0x40] sm:$0xff]
    %v248 = vld [vmem:[%s4 + $0x48] sm:$0xff]
    %v249 = vld [vmem:[%s4 + $0x50] sm:$0xff]
    %v250 = vld [vmem:[%s4 + $0x58] sm:$0xff]
    %v251 = vpack.c.bf16 %v234, %v231
    %v252 = vld [vmem:[#allocation7] sm:$0xff]
    %v253 = vld [vmem:[#allocation7 + $0x8] sm:$0xff]
    %v254 = vld [vmem:[#allocation7 + $0x10] sm:$0xff]
    %v255 = vld [vmem:[#allocation7 + $0x18] sm:$0xff]
    %v256 = vld [vmem:[#allocation7 + $0x20] sm:$0xff]
    %v257 = vld [vmem:[#allocation7 + $0x28] sm:$0xff]
    %v258 = vld [vmem:[#allocation7 + $0x30] sm:$0xff]
    %v259 = vld [vmem:[#allocation7 + $0x38] sm:$0xff]
    %v260 = vld [vmem:[#allocation7 + $0x40] sm:$0xff]
    %v261 = vld [vmem:[#allocation7 + $0x48] sm:$0xff]
    %v262 = vld [vmem:[#allocation7 + $0x50] sm:$0xff]
    %v263 = vld [vmem:[#allocation7 + $0x58] sm:$0xff]
    %v264 = vld [vmem:[#allocation7 + $0x60] sm:$0xff]
    %v265 = vld [vmem:[#allocation7 + $0x68] sm:$0xff]
    %v266 = vld [vmem:[#allocation7 + $0x70] sm:$0xff]
    %v267 = vld [vmem:[#allocation7 + $0x78] sm:$0xff]
    %v268 = vld [vmem:[#allocation7 + $0x80] sm:$0xff]
    %v269 = vld [vmem:[#allocation7 + $0x88] sm:$0xff]
    %v270 = vld [vmem:[#allocation7 + $0x90] sm:$0xff]
    %v271 = vld [vmem:[#allocation7 + $0x98] sm:$0xff]
    %v272 = vld [vmem:[#allocation7 + $0xa0] sm:$0xff]
    %v273 = vld [vmem:[#allocation7 + $0xa8] sm:$0xff]
    %v274 = vld [vmem:[#allocation7 + $0xb0] sm:$0xff]
    %v275 = vld [vmem:[#allocation7 + $0xb8] sm:$0xff]
    %v276 = vld [vmem:[#allocation7 + $0xc0] sm:$0xff]
    %v277 = vld [vmem:[#allocation7 + $0xc8] sm:$0xff]
    %v278 = vld [vmem:[#allocation7 + $0xd0] sm:$0xff]
    %v279 = vld [vmem:[#allocation7 + $0xd8] sm:$0xff]
    %v280 = vld [vmem:[#allocation7 + $0xe0] sm:$0xff]
    %v281 = vld [vmem:[#allocation7 + $0xe8] sm:$0xff]
    %v282 = vld [vmem:[#allocation7 + $0xf0] sm:$0xff]
    %v283 = vld [vmem:[#allocation7 + $0xf8] sm:$0xff]
    %v316 = vunpack.c.l.b16 %v252
    %v317 = vunpack.c.h.b16 %v252
    %v318 = vunpack.c.l.b16 %v253
    %v319 = vunpack.c.h.b16 %v253
    %v320 = vunpack.c.l.b16 %v254
    %v321 = vunpack.c.h.b16 %v254
    %v322 = vunpack.c.l.b16 %v255
    %v323 = vunpack.c.h.b16 %v255
    %v324 = vunpack.c.l.b16 %v256
    %v325 = vunpack.c.h.b16 %v256
    %v326 = vunpack.c.l.b16 %v257
    %v327 = vunpack.c.h.b16 %v257
    %v328 = vunpack.c.l.b16 %v258
    %v329 = vunpack.c.h.b16 %v258
    %v330 = vunpack.c.l.b16 %v259
    %v331 = vunpack.c.h.b16 %v259
    %v332 = vunpack.c.l.b16 %v260
    %v333 = vunpack.c.h.b16 %v260
    %v334 = vunpack.c.l.b16 %v261
    %v335 = vunpack.c.h.b16 %v261
    %v336 = vunpack.c.l.b16 %v262
    %v337 = vunpack.c.h.b16 %v262
    %v338 = vunpack.c.l.b16 %v263
    %v339 = vunpack.c.h.b16 %v263
    %v340 = vunpack.c.l.b16 %v264
    %v341 = vunpack.c.h.b16 %v264
    %v342 = vunpack.c.l.b16 %v265
    %v343 = vunpack.c.h.b16 %v265
    %v344 = vunpack.c.l.b16 %v266
    %v345 = vunpack.c.h.b16 %v266
    %v346 = vunpack.c.l.b16 %v267
    %v347 = vunpack.c.h.b16 %v267
    %v348 = vunpack.c.l.b16 %v268
    %v349 = vunpack.c.h.b16 %v268
    %v350 = vunpack.c.l.b16 %v269
    %v351 = vunpack.c.h.b16 %v269
    %v352 = vunpack.c.l.b16 %v270
    %v353 = vunpack.c.h.b16 %v270
    %v354 = vunpack.c.l.b16 %v271
    %v355 = vunpack.c.h.b16 %v271
    %v356 = vunpack.c.l.b16 %v272
    %v357 = vunpack.c.h.b16 %v272
    %v358 = vunpack.c.l.b16 %v273
    %v359 = vunpack.c.h.b16 %v273
    %v360 = vunpack.c.l.b16 %v274
    %v361 = vunpack.c.h.b16 %v274
    %v362 = vunpack.c.l.b16 %v275
    %v363 = vunpack.c.h.b16 %v275
    %v364 = vunpack.c.l.b16 %v276
    %v365 = vunpack.c.h.b16 %v276
    %v366 = vunpack.c.l.b16 %v277
    %v367 = vunpack.c.h.b16 %v277
    %v368 = vunpack.c.l.b16 %v278
    %v369 = vunpack.c.h.b16 %v278
    %v370 = vunpack.c.l.b16 %v279
    %v371 = vunpack.c.h.b16 %v279
    %v372 = vunpack.c.l.b16 %v280
    %v373 = vunpack.c.h.b16 %v280
    %v374 = vunpack.c.l.b16 %v281
    %v375 = vunpack.c.h.b16 %v281
    %v376 = vunpack.c.l.b16 %v282
    %v377 = vunpack.c.h.b16 %v282
    %v378 = vunpack.c.l.b16 %v283
    %v379 = vunpack.c.h.b16 %v283
    %v380 = vpack.c.b16 %v320, %v316
    %v381 = vpack.c.b16 %v321, %v317
    %v382 = vpack.c.b16 %v322, %v318
    %v383 = vpack.c.b16 %v323, %v319
    %v384 = vpack.c.b16 %v328, %v324
    %v385 = vpack.c.b16 %v329, %v325
    %v386 = vpack.c.b16 %v330, %v326
    %v387 = vpack.c.b16 %v331, %v327
    %v388 = vpack.c.b16 %v336, %v332
    %v389 = vpack.c.b16 %v337, %v333
    %v390 = vpack.c.b16 %v338, %v334
    %v391 = vpack.c.b16 %v339, %v335
    %v392 = vpack.c.b16 %v344, %v340
    %v393 = vpack.c.b16 %v345, %v341
    %v394 = vpack.c.b16 %v346, %v342
    %v395 = vpack.c.b16 %v347, %v343
    %v396 = vpack.c.b16 %v352, %v348
    %v397 = vpack.c.b16 %v353, %v349
    %v398 = vpack.c.b16 %v354, %v350
    %v399 = vpack.c.b16 %v355, %v351
    %v400 = vpack.c.b16 %v360, %v356
    %v401 = vpack.c.b16 %v361, %v357
    %v402 = vpack.c.b16 %v362, %v358
    %v403 = vpack.c.b16 %v363, %v359
    %v404 = vpack.c.b16 %v368, %v364
    %v405 = vpack.c.b16 %v369, %v365
    %v406 = vpack.c.b16 %v370, %v366
    %v407 = vpack.c.b16 %v371, %v367
    %v408 = vpack.c.b16 %v376, %v372
    %v409 = vpack.c.b16 %v377, %v373
    %v410 = vpack.c.b16 %v378, %v374
    %v411 = vpack.c.b16 %v379, %v375
    %444 = vmatprep.subr.bf16.mxu0 %v381
    %445 = vmatpush1.bf16.msra.mxu0 %v380
    %446 = vmatprep.subr.bf16.mxu0 %v385
    %447 = vmatpush1.bf16.msra.mxu0 %v384
    %448 = vmatprep.subr.bf16.mxu0 %v389
    %449 = vmatpush1.bf16.msra.mxu0 %v388
    %450 = vmatprep.subr.bf16.mxu0 %v393
    %451 = vmatpush1.bf16.msra.mxu0 %v392
    %452 = vmatprep.subr.bf16.mxu0 %v397
    %453 = vmatpush1.bf16.msra.mxu0 %v396
    %454 = vmatprep.subr.bf16.mxu0 %v401
    %455 = vmatpush1.bf16.msra.mxu0 %v400
    %456 = vmatprep.subr.bf16.mxu0 %v405
    %457 = vmatpush1.bf16.msra.mxu0 %v404
    %458 = vmatprep.subr.bf16.mxu0 %v409
    %459 = vmatpush1.bf16.msra.mxu0 %v408
    %460 = vmatprep.subr.bf16.mxu0 0
    %461 = vmatpush1.bf16.msra.mxu0 0
    %462 = vmatprep.subr.bf16.mxu0 0
    %463 = vmatpush1.bf16.msra.mxu0 0
    %464 = vmatprep.subr.bf16.mxu0 0
    %465 = vmatpush1.bf16.msra.mxu0 0
    %466 = vmatprep.subr.bf16.mxu0 0
    %467 = vmatpush1.bf16.msra.mxu0 0
    %468 = vmatprep.subr.bf16.mxu0 0
    %469 = vmatpush1.bf16.msra.mxu0 0
    %470 = vmatprep.subr.bf16.mxu0 0
    %471 = vmatpush1.bf16.msra.mxu0 0
    %472 = vmatprep.subr.bf16.mxu0 0
    %473 = vmatpush1.bf16.msra.mxu0 0
    %474 = vmatprep.subr.bf16.mxu0 0
    %475 = vmatpush1.bf16.msra.mxu0 0
    %476 = vmatprep.mubr.bf16.mxu0 0
    %477 = vmatmul.mubr.bf16.gmra.mrb[0].mxu0 %v251
    %v478 = vpop.f32.mrb[0].mxu0
    %v479 = vadd.f32 0.0, %v478
    %v480 = vpop.f32.mrb[0].mxu0
    %v481 = vadd.f32 0.0, %v480
    %v482 = vpop.f32.mrb[0].mxu0
    %v483 = vadd.f32 0.0, %v482
    %v484 = vpop.f32.mrb[0].mxu0
    %v485 = vadd.f32 0.0, %v484
    %486 = vdwg.mxu0
    %487 = vmatprep.subr.bf16.mxu0 %v383
    %488 = vmatpush1.bf16.msra.mxu0 %v382
    %489 = vmatprep.subr.bf16.mxu0 %v387
    %490 = vmatpush1.bf16.msra.mxu0 %v386
    %491 = vmatprep.subr.bf16.mxu0 %v391
    %492 = vmatpush1.bf16.msra.mxu0 %v390
    %493 = vmatprep.subr.bf16.mxu0 %v395
    %494 = vmatpush1.bf16.msra.mxu0 %v394
    %495 = vmatprep.subr.bf16.mxu0 %v399
    %496 = vmatpush1.bf16.msra.mxu0 %v398
    %497 = vmatprep.subr.bf16.mxu0 %v403
    %498 = vmatpush1.bf16.msra.mxu0 %v402
    %499 = vmatprep.subr.bf16.mxu0 %v407
    %500 = vmatpush1.bf16.msra.mxu0 %v406
    %501 = vmatprep.subr.bf16.mxu0 %v411
    %502 = vmatpush1.bf16.msra.mxu0 %v410
    %503 = vmatprep.subr.bf16.mxu0 0
    %504 = vmatpush1.bf16.msra.mxu0 0
    %505 = vmatprep.subr.bf16.mxu0 0
    %506 = vmatpush1.bf16.msra.mxu0 0
    %507 = vmatprep.subr.bf16.mxu0 0
    %508 = vmatpush1.bf16.msra.mxu0 0
    %509 = vmatprep.subr.bf16.mxu0 0
    %510 = vmatpush1.bf16.msra.mxu0 0
    %511 = vmatprep.subr.bf16.mxu0 0
    %512 = vmatpush1.bf16.msra.mxu0 0
    %513 = vmatprep.subr.bf16.mxu0 0
    %514 = vmatpush1.bf16.msra.mxu0 0
    %515 = vmatprep.subr.bf16.mxu0 0
    %516 = vmatpush1.bf16.msra.mxu0 0
    %517 = vmatprep.subr.bf16.mxu0 0
    %518 = vmatpush1.bf16.msra.mxu0 0
    %519 = vmatprep.mubr.bf16.mxu0 0
    %520 = vmatmul.mubr.bf16.gmra.mrb[0].mxu0 %v251
    %v521 = vpop.f32.mrb[0].mxu0
    %v522 = vadd.f32 0.0, %v521
    %v523 = vpop.f32.mrb[0].mxu0
    %v524 = vadd.f32 0.0, %v523
    %v525 = vpop.f32.mrb[0].mxu0
    %v526 = vadd.f32 0.0, %v525
    %v527 = vpop.f32.mrb[0].mxu0
    %v528 = vadd.f32 0.0, %v527
    %529 = vdwg.mxu0
    %v532 = vunpack.c.l.b16 %v237
    %v533 = vunpack.c.l.b16 %v238
    %v534 = vpack.c.b16 %v533, %v532
    %v547 = vunpack.c.l.b16 %v239
    %v548 = vunpack.c.h.b16 %v239
    %v549 = vunpack.c.l.b16 %v240
    %v550 = vunpack.c.h.b16 %v240
    %v551 = vunpack.c.l.b16 %v241
    %v552 = vunpack.c.h.b16 %v241
    %v553 = vunpack.c.l.b16 %v242
    %v554 = vunpack.c.h.b16 %v242
    %v555 = vunpack.c.l.b16 %v243
    %v556 = vunpack.c.h.b16 %v243
    %v557 = vunpack.c.l.b16 %v244
    %v558 = vunpack.c.h.b16 %v244
    %v559 = vunpack.c.l.b16 %v245
    %v560 = vunpack.c.h.b16 %v245
    %v561 = vunpack.c.l.b16 %v246
    %v562 = vunpack.c.h.b16 %v246
    %v563 = vunpack.c.l.b16 %v247
    %v564 = vunpack.c.h.b16 %v247
    %v565 = vunpack.c.l.b16 %v248
    %v566 = vunpack.c.h.b16 %v248
    %v567 = vunpack.c.l.b16 %v249
    %v568 = vunpack.c.h.b16 %v249
    %v569 = vunpack.c.l.b16 %v250
    %v570 = vunpack.c.h.b16 %v250
    %v571 = vpack.c.b16 %v551, %v547
    %v572 = vpack.c.b16 %v552, %v548
    %v573 = vpack.c.b16 %v553, %v549
    %v574 = vpack.c.b16 %v554, %v550
    %v575 = vpack.c.b16 %v559, %v555
    %v576 = vpack.c.b16 %v560, %v556
    %v577 = vpack.c.b16 %v561, %v557
    %v578 = vpack.c.b16 %v562, %v558
    %v579 = vpack.c.b16 %v567, %v563
    %v580 = vpack.c.b16 %v568, %v564
    %v581 = vpack.c.b16 %v569, %v565
    %v582 = vpack.c.b16 %v570, %v566
    %vm595 = vcmask 392192
    %v597 = vsel %vm595, %v534, 0
    %599 = vmatprep.subr.bf16.mxu0 %v572
    %600 = vmatpush1.bf16.msra.mxu0 %v571
    %601 = vmatprep.subr.bf16.mxu0 %v576
    %602 = vmatpush1.bf16.msra.mxu0 %v575
    %603 = vmatprep.subr.bf16.mxu0 %v580
    %604 = vmatpush1.bf16.msra.mxu0 %v579
    %605 = vmatprep.subr.bf16.mxu0 0
    %606 = vmatpush1.bf16.msra.mxu0 0
    %607 = vmatprep.subr.bf16.mxu0 0
    %608 = vmatpush1.bf16.msra.mxu0 0
    %609 = vmatprep.subr.bf16.mxu0 0
    %610 = vmatpush1.bf16.msra.mxu0 0
    %611 = vmatprep.subr.bf16.mxu0 0
    %612 = vmatpush1.bf16.msra.mxu0 0
    %613 = vmatprep.subr.bf16.mxu0 0
    %614 = vmatpush1.bf16.msra.mxu0 0
    %615 = vmatprep.subr.bf16.mxu0 0
    %616 = vmatpush1.bf16.msra.mxu0 0
    %617 = vmatprep.subr.bf16.mxu0 0
    %618 = vmatpush1.bf16.msra.mxu0 0
    %619 = vmatprep.subr.bf16.mxu0 0
    %620 = vmatpush1.bf16.msra.mxu0 0
    %621 = vmatprep.subr.bf16.mxu0 0
    %622 = vmatpush1.bf16.msra.mxu0 0
    %623 = vmatprep.subr.bf16.mxu0 0
    %624 = vmatpush1.bf16.msra.mxu0 0
    %625 = vmatprep.subr.bf16.mxu0 0
    %626 = vmatpush1.bf16.msra.mxu0 0
    %627 = vmatprep.subr.bf16.mxu0 0
    %628 = vmatpush1.bf16.msra.mxu0 0
    %629 = vmatprep.subr.bf16.mxu0 0
    %630 = vmatpush1.bf16.msra.mxu0 0
    %631 = vmatprep.mubr.bf16.mxu0 0
    %632 = vmatmul.mubr.bf16.gmra.mrb[0].mxu0 %v597
    %v633 = vpop.f32.mrb[0].mxu0
    %v634 = vadd.f32 %v479, %v633
    %v635 = vpop.f32.mrb[0].mxu0
    %v636 = vadd.f32 %v481, %v635
    %v637 = vpop.f32.mrb[0].mxu0
    %v638 = vadd.f32 %v483, %v637
    %v639 = vpop.f32.mrb[0].mxu0
    %v640 = vadd.f32 %v485, %v639
    %641 = vdwg.mxu0
    %642 = vmatprep.subr.bf16.mxu0 %v574
    %643 = vmatpush1.bf16.msra.mxu0 %v573
    %644 = vmatprep.subr.bf16.mxu0 %v578
    %645 = vmatpush1.bf16.msra.mxu0 %v577
    %646 = vmatprep.subr.bf16.mxu0 %v582
    %647 = vmatpush1.bf16.msra.mxu0 %v581
    %648 = vmatprep.subr.bf16.mxu0 0
    %649 = vmatpush1.bf16.msra.mxu0 0
    %650 = vmatprep.subr.bf16.mxu0 0
    %651 = vmatpush1.bf16.msra.mxu0 0
    %652 = vmatprep.subr.bf16.mxu0 0
    %653 = vmatpush1.bf16.msra.mxu0 0
    %654 = vmatprep.subr.bf16.mxu0 0
    %655 = vmatpush1.bf16.msra.mxu0 0
    %656 = vmatprep.subr.bf16.mxu0 0
    %657 = vmatpush1.bf16.msra.mxu0 0
    %658 = vmatprep.subr.bf16.mxu0 0
    %659 = vmatpush1.bf16.msra.mxu0 0
    %660 = vmatprep.subr.bf16.mxu0 0
    %661 = vmatpush1.bf16.msra.mxu0 0
    %662 = vmatprep.subr.bf16.mxu0 0
    %663 = vmatpush1.bf16.msra.mxu0 0
    %664 = vmatprep.subr.bf16.mxu0 0
    %665 = vmatpush1.bf16.msra.mxu0 0
    %666 = vmatprep.subr.bf16.mxu0 0
    %667 = vmatpush1.bf16.msra.mxu0 0
    %668 = vmatprep.subr.bf16.mxu0 0
    %669 = vmatpush1.bf16.msra.mxu0 0
    %670 = vmatprep.subr.bf16.mxu0 0
    %671 = vmatpush1.bf16.msra.mxu0 0
    %672 = vmatprep.subr.bf16.mxu0 0
    %673 = vmatpush1.bf16.msra.mxu0 0
    %674 = vmatprep.mubr.bf16.mxu0 0
    %675 = vmatmul.mubr.bf16.gmra.mrb[0].mxu0 %v597
    %v676 = vpop.f32.mrb[0].mxu0
    %v677 = vadd.f32 %v522, %v676
    %v678 = vpop.f32.mrb[0].mxu0
    %v679 = vadd.f32 %v524, %v678
    %v680 = vpop.f32.mrb[0].mxu0
    %v681 = vadd.f32 %v526, %v680
    %v682 = vpop.f32.mrb[0].mxu0
    %v683 = vadd.f32 %v528, %v682
    %684 = vdwg.mxu0
    %v685 = vlaneseq
    %v686 = vshrl.u32 %v685, 7
    %v687 = vsub.s32 0, %v686
    %v688 = vrot.slane %v97, %v687
    %v689 = vlaneseq
    %v690 = vshrl.u32 %v689, 7
    %v691 = vsub.s32 0, %v690
    %v692 = vrot.slane %v98, %v691
    %v693 = vlaneseq
    %v694 = vshrl.u32 %v693, 7
    %v695 = vsub.s32 0, %v694
    %v696 = vrot.slane %v99, %v695
    %v697 = vlaneseq
    %v698 = vshrl.u32 %v697, 7
    %v699 = vsub.s32 0, %v698
    %v700 = vrot.slane %v100, %v699
    %v701 = vadd.f32 %v634, %v688
    %v702 = vadd.f32 %v636, %v692
    %v703 = vadd.f32 %v677, %v696
    %v704 = vadd.f32 %v679, %v700
    %v705 = vadd.f32 %v638, %v688
    %v706 = vadd.f32 %v640, %v692
    %v707 = vadd.f32 %v681, %v696
    %v708 = vadd.f32 %v683, %v700
    %v709 = vmax.f32 %v701, 0.0
    %v710 = vmax.f32 %v702, 0.0
    %v711 = vmax.f32 %v703, 0.0
    %v712 = vmax.f32 %v704, 0.0
    %v713 = vmax.f32 %v705, 0.0
    %v714 = vmax.f32 %v706, 0.0
    %v715 = vmax.f32 %v707, 0.0
    %v716 = vmax.f32 %v708, 0.0
    %v717 = vpack.c.bf16 %v713, %v709
    %v718 = vpack.c.bf16 %v714, %v710
    %v719 = vpack.c.bf16 %v715, %v711
    %v720 = vpack.c.bf16 %v716, %v712
    %v721 = vld [vmem:[#allocation8] sm:$0xff]
    %v722 = vld [vmem:[#allocation8 + $0x8] sm:$0xff]
    %v723 = vld [vmem:[#allocation8 + $0x10] sm:$0xff]
    %v724 = vld [vmem:[#allocation8 + $0x18] sm:$0xff]
    %v725 = vld [vmem:[#allocation8 + $0x20] sm:$0xff]
    %v726 = vld [vmem:[#allocation8 + $0x28] sm:$0xff]
    %v727 = vld [vmem:[#allocation8 + $0x30] sm:$0xff]
    %v728 = vld [vmem:[#allocation8 + $0x38] sm:$0xff]
    %v729 = vld [vmem:[#allocation8 + $0x40] sm:$0xff]
    %v730 = vld [vmem:[#allocation8 + $0x48] sm:$0xff]
    %v731 = vld [vmem:[#allocation8 + $0x50] sm:$0xff]
    %v732 = vld [vmem:[#allocation8 + $0x58] sm:$0xff]
    %v733 = vld [vmem:[#allocation8 + $0x60] sm:$0xff]
    %v734 = vld [vmem:[#allocation8 + $0x68] sm:$0xff]
    %v735 = vld [vmem:[#allocation8 + $0x70] sm:$0xff]
    %v736 = vld [vmem:[#allocation8 + $0x78] sm:$0xff]
    %v737 = vld [vmem:[#allocation8 + $0x80] sm:$0xff]
    %v738 = vld [vmem:[#allocation8 + $0x88] sm:$0xff]
    %v739 = vld [vmem:[#allocation8 + $0x90] sm:$0xff]
    %v740 = vld [vmem:[#allocation8 + $0x98] sm:$0xff]
    %v741 = vld [vmem:[#allocation8 + $0xa0] sm:$0xff]
    %v742 = vld [vmem:[#allocation8 + $0xa8] sm:$0xff]
    %v743 = vld [vmem:[#allocation8 + $0xb0] sm:$0xff]
    %v744 = vld [vmem:[#allocation8 + $0xb8] sm:$0xff]
    %v745 = vld [vmem:[#allocation8 + $0xc0] sm:$0xff]
    %v746 = vld [vmem:[#allocation8 + $0xc8] sm:$0xff]
    %v747 = vld [vmem:[#allocation8 + $0xd0] sm:$0xff]
    %v748 = vld [vmem:[#allocation8 + $0xd8] sm:$0xff]
    %v749 = vld [vmem:[#allocation8 + $0xe0] sm:$0xff]
    %v750 = vld [vmem:[#allocation8 + $0xe8] sm:$0xff]
    %v751 = vld [vmem:[#allocation8 + $0xf0] sm:$0xff]
    %v752 = vld [vmem:[#allocation8 + $0xf8] sm:$0xff]
    %v753 = vld [vmem:[#allocation8 + $0x100] sm:$0xff]
    %v754 = vld [vmem:[#allocation8 + $0x108] sm:$0xff]
    %v755 = vld [vmem:[#allocation8 + $0x110] sm:$0xff]
    %v756 = vld [vmem:[#allocation8 + $0x118] sm:$0xff]
    %v757 = vld [vmem:[#allocation8 + $0x120] sm:$0xff]
    %v758 = vld [vmem:[#allocation8 + $0x128] sm:$0xff]
    %v759 = vld [vmem:[#allocation8 + $0x130] sm:$0xff]
    %v760 = vld [vmem:[#allocation8 + $0x138] sm:$0xff]
    %v761 = vld [vmem:[#allocation8 + $0x140] sm:$0xff]
    %v762 = vld [vmem:[#allocation8 + $0x148] sm:$0xff]
    %v763 = vld [vmem:[#allocation8 + $0x150] sm:$0xff]
    %v764 = vld [vmem:[#allocation8 + $0x158] sm:$0xff]
    %v765 = vld [vmem:[#allocation8 + $0x160] sm:$0xff]
    %v766 = vld [vmem:[#allocation8 + $0x168] sm:$0xff]
    %v767 = vld [vmem:[#allocation8 + $0x170] sm:$0xff]
    %v768 = vld [vmem:[#allocation8 + $0x178] sm:$0xff]
    %v769 = vld [vmem:[#allocation8 + $0x180] sm:$0xff]
    %v770 = vld [vmem:[#allocation8 + $0x188] sm:$0xff]
    %v771 = vld [vmem:[#allocation8 + $0x190] sm:$0xff]
    %v772 = vld [vmem:[#allocation8 + $0x198] sm:$0xff]
    %v773 = vld [vmem:[#allocation8 + $0x1a0] sm:$0xff]
    %v774 = vld [vmem:[#allocation8 + $0x1a8] sm:$0xff]
    %v775 = vld [vmem:[#allocation8 + $0x1b0] sm:$0xff]
    %v776 = vld [vmem:[#allocation8 + $0x1b8] sm:$0xff]
    %v777 = vld [vmem:[#allocation8 + $0x1c0] sm:$0xff]
    %v778 = vld [vmem:[#allocation8 + $0x1c8] sm:$0xff]
    %v779 = vld [vmem:[#allocation8 + $0x1d0] sm:$0xff]
    %v780 = vld [vmem:[#allocation8 + $0x1d8] sm:$0xff]
    %v781 = vld [vmem:[#allocation8 + $0x1e0] sm:$0xff]
    %v782 = vld [vmem:[#allocation8 + $0x1e8] sm:$0xff]
    %v783 = vld [vmem:[#allocation8 + $0x1f0] sm:$0xff]
    %v784 = vld [vmem:[#allocation8 + $0x1f8] sm:$0xff]
    %v785 = vld [vmem:[#allocation8 + $0x200] sm:$0xff]
    %v786 = vld [vmem:[#allocation8 + $0x208] sm:$0xff]
    %v787 = vld [vmem:[#allocation8 + $0x210] sm:$0xff]
    %v788 = vld [vmem:[#allocation8 + $0x218] sm:$0xff]
    %v789 = vld [vmem:[#allocation8 + $0x220] sm:$0xff]
    %v790 = vld [vmem:[#allocation8 + $0x228] sm:$0xff]
    %v791 = vld [vmem:[#allocation8 + $0x230] sm:$0xff]
    %v792 = vld [vmem:[#allocation8 + $0x238] sm:$0xff]
    %v793 = vld [vmem:[#allocation8 + $0x240] sm:$0xff]
    %v794 = vld [vmem:[#allocation8 + $0x248] sm:$0xff]
    %v795 = vld [vmem:[#allocation8 + $0x250] sm:$0xff]
    %v796 = vld [vmem:[#allocation8 + $0x258] sm:$0xff]
    %v797 = vld [vmem:[#allocation8 + $0x260] sm:$0xff]
    %v798 = vld [vmem:[#allocation8 + $0x268] sm:$0xff]
    %v799 = vld [vmem:[#allocation8 + $0x270] sm:$0xff]
    %v800 = vld [vmem:[#allocation8 + $0x278] sm:$0xff]
    %v801 = vld [vmem:[#allocation8 + $0x280] sm:$0xff]
    %v802 = vld [vmem:[#allocation8 + $0x288] sm:$0xff]
    %v803 = vld [vmem:[#allocation8 + $0x290] sm:$0xff]
    %v804 = vld [vmem:[#allocation8 + $0x298] sm:$0xff]
    %v805 = vld [vmem:[#allocation8 + $0x2a0] sm:$0xff]
    %v806 = vld [vmem:[#allocation8 + $0x2a8] sm:$0xff]
    %v807 = vld [vmem:[#allocation8 + $0x2b0] sm:$0xff]
    %v808 = vld [vmem:[#allocation8 + $0x2b8] sm:$0xff]
    %v809 = vld [vmem:[#allocation8 + $0x2c0] sm:$0xff]
    %v810 = vld [vmem:[#allocation8 + $0x2c8] sm:$0xff]
    %v811 = vld [vmem:[#allocation8 + $0x2d0] sm:$0xff]
    %v812 = vld [vmem:[#allocation8 + $0x2d8] sm:$0xff]
    %v813 = vld [vmem:[#allocation8 + $0x2e0] sm:$0xff]
    %v814 = vld [vmem:[#allocation8 + $0x2e8] sm:$0xff]
    %v815 = vld [vmem:[#allocation8 + $0x2f0] sm:$0xff]
    %v816 = vld [vmem:[#allocation8 + $0x2f8] sm:$0xff]
    %v817 = vld [vmem:[#allocation8 + $0x300] sm:$0xff]
    %v818 = vld [vmem:[#allocation8 + $0x308] sm:$0xff]
    %v819 = vld [vmem:[#allocation8 + $0x310] sm:$0xff]
    %v820 = vld [vmem:[#allocation8 + $0x318] sm:$0xff]
    %v821 = vld [vmem:[#allocation8 + $0x320] sm:$0xff]
    %v822 = vld [vmem:[#allocation8 + $0x328] sm:$0xff]
    %v823 = vld [vmem:[#allocation8 + $0x330] sm:$0xff]
    %v824 = vld [vmem:[#allocation8 + $0x338] sm:$0xff]
    %v825 = vld [vmem:[#allocation8 + $0x340] sm:$0xff]
    %v826 = vld [vmem:[#allocation8 + $0x348] sm:$0xff]
    %v827 = vld [vmem:[#allocation8 + $0x350] sm:$0xff]
    %v828 = vld [vmem:[#allocation8 + $0x358] sm:$0xff]
    %v829 = vld [vmem:[#allocation8 + $0x360] sm:$0xff]
    %v830 = vld [vmem:[#allocation8 + $0x368] sm:$0xff]
    %v831 = vld [vmem:[#allocation8 + $0x370] sm:$0xff]
    %v832 = vld [vmem:[#allocation8 + $0x378] sm:$0xff]
    %v833 = vld [vmem:[#allocation8 + $0x380] sm:$0xff]
    %v834 = vld [vmem:[#allocation8 + $0x388] sm:$0xff]
    %v835 = vld [vmem:[#allocation8 + $0x390] sm:$0xff]
    %v836 = vld [vmem:[#allocation8 + $0x398] sm:$0xff]
    %v837 = vld [vmem:[#allocation8 + $0x3a0] sm:$0xff]
    %v838 = vld [vmem:[#allocation8 + $0x3a8] sm:$0xff]
    %v839 = vld [vmem:[#allocation8 + $0x3b0] sm:$0xff]
    %v840 = vld [vmem:[#allocation8 + $0x3b8] sm:$0xff]
    %v841 = vld [vmem:[#allocation8 + $0x3c0] sm:$0xff]
    %v842 = vld [vmem:[#allocation8 + $0x3c8] sm:$0xff]
    %v843 = vld [vmem:[#allocation8 + $0x3d0] sm:$0xff]
    %v844 = vld [vmem:[#allocation8 + $0x3d8] sm:$0xff]
    %v845 = vld [vmem:[#allocation8 + $0x3e0] sm:$0xff]
    %v846 = vld [vmem:[#allocation8 + $0x3e8] sm:$0xff]
    %v847 = vld [vmem:[#allocation8 + $0x3f0] sm:$0xff]
    %v848 = vld [vmem:[#allocation8 + $0x3f8] sm:$0xff]
    %v849 = vlaneseq
    %v850 = vshrl.u32 %v849, 7
    %v851 = vsub.s32 1, %v850
    %v852 = vrot.slane %v97, %v851
    %v853 = vlaneseq
    %v854 = vshrl.u32 %v853, 7
    %v855 = vsub.s32 1, %v854
    %v856 = vrot.slane %v98, %v855
    %v857 = vlaneseq
    %v858 = vshrl.u32 %v857, 7
    %v859 = vsub.s32 1, %v858
    %v860 = vrot.slane %v99, %v859
    %v861 = vlaneseq
    %v862 = vshrl.u32 %v861, 7
    %v863 = vsub.s32 1, %v862
    %v864 = vrot.slane %v100, %v863
    %v993 = vunpack.c.l.b16 %v721
    %v994 = vunpack.c.h.b16 %v721
    %v995 = vunpack.c.l.b16 %v722
    %v996 = vunpack.c.h.b16 %v722
    %v997 = vunpack.c.l.b16 %v723
    %v998 = vunpack.c.h.b16 %v723
    %v999 = vunpack.c.l.b16 %v724
    %v1000 = vunpack.c.h.b16 %v724
    %v1001 = vunpack.c.l.b16 %v725
    %v1002 = vunpack.c.h.b16 %v725
    %v1003 = vunpack.c.l.b16 %v726
    %v1004 = vunpack.c.h.b16 %v726
    %v1005 = vunpack.c.l.b16 %v727
    %v1006 = vunpack.c.h.b16 %v727
    %v1007 = vunpack.c.l.b16 %v728
    %v1008 = vunpack.c.h.b16 %v728
    %v1009 = vunpack.c.l.b16 %v729
    %v1010 = vunpack.c.h.b16 %v729
    %v1011 = vunpack.c.l.b16 %v730
    %v1012 = vunpack.c.h.b16 %v730
    %v1013 = vunpack.c.l.b16 %v731
    %v1014 = vunpack.c.h.b16 %v731
    %v1015 = vunpack.c.l.b16 %v732
    %v1016 = vunpack.c.h.b16 %v732
    %v1017 = vunpack.c.l.b16 %v733
    %v1018 = vunpack.c.h.b16 %v733
    %v1019 = vunpack.c.l.b16 %v734
    %v1020 = vunpack.c.h.b16 %v734
    %v1021 = vunpack.c.l.b16 %v735
    %v1022 = vunpack.c.h.b16 %v735
    %v1023 = vunpack.c.l.b16 %v736
    %v1024 = vunpack.c.h.b16 %v736
    %v1025 = vunpack.c.l.b16 %v737
    %v1026 = vunpack.c.h.b16 %v737
    %v1027 = vunpack.c.l.b16 %v738
    %v1028 = vunpack.c.h.b16 %v738
    %v1029 = vunpack.c.l.b16 %v739
    %v1030 = vunpack.c.h.b16 %v739
    %v1031 = vunpack.c.l.b16 %v740
    %v1032 = vunpack.c.h.b16 %v740
    %v1033 = vunpack.c.l.b16 %v741
    %v1034 = vunpack.c.h.b16 %v741
    %v1035 = vunpack.c.l.b16 %v742
    %v1036 = vunpack.c.h.b16 %v742
    %v1037 = vunpack.c.l.b16 %v743
    %v1038 = vunpack.c.h.b16 %v743
    %v1039 = vunpack.c.l.b16 %v744
    %v1040 = vunpack.c.h.b16 %v744
    %v1041 = vunpack.c.l.b16 %v745
    %v1042 = vunpack.c.h.b16 %v745
    %v1043 = vunpack.c.l.b16 %v746
    %v1044 = vunpack.c.h.b16 %v746
    %v1045 = vunpack.c.l.b16 %v747
    %v1046 = vunpack.c.h.b16 %v747
    %v1047 = vunpack.c.l.b16 %v748
    %v1048 = vunpack.c.h.b16 %v748
    %v1049 = vunpack.c.l.b16 %v749
    %v1050 = vunpack.c.h.b16 %v749
    %v1051 = vunpack.c.l.b16 %v750
    %v1052 = vunpack.c.h.b16 %v750
    %v1053 = vunpack.c.l.b16 %v751
    %v1054 = vunpack.c.h.b16 %v751
    %v1055 = vunpack.c.l.b16 %v752
    %v1056 = vunpack.c.h.b16 %v752
    %v1057 = vunpack.c.l.b16 %v753
    %v1058 = vunpack.c.h.b16 %v753
    %v1059 = vunpack.c.l.b16 %v754
    %v1060 = vunpack.c.h.b16 %v754
    %v1061 = vunpack.c.l.b16 %v755
    %v1062 = vunpack.c.h.b16 %v755
    %v1063 = vunpack.c.l.b16 %v756
    %v1064 = vunpack.c.h.b16 %v756
    %v1065 = vunpack.c.l.b16 %v757
    %v1066 = vunpack.c.h.b16 %v757
    %v1067 = vunpack.c.l.b16 %v758
    %v1068 = vunpack.c.h.b16 %v758
    %v1069 = vunpack.c.l.b16 %v759
    %v1070 = vunpack.c.h.b16 %v759
    %v1071 = vunpack.c.l.b16 %v760
    %v1072 = vunpack.c.h.b16 %v760
    %v1073 = vunpack.c.l.b16 %v761
    %v1074 = vunpack.c.h.b16 %v761
    %v1075 = vunpack.c.l.b16 %v762
    %v1076 = vunpack.c.h.b16 %v762
    %v1077 = vunpack.c.l.b16 %v763
    %v1078 = vunpack.c.h.b16 %v763
    %v1079 = vunpack.c.l.b16 %v764
    %v1080 = vunpack.c.h.b16 %v764
    %v1081 = vunpack.c.l.b16 %v765
    %v1082 = vunpack.c.h.b16 %v765
    %v1083 = vunpack.c.l.b16 %v766
    %v1084 = vunpack.c.h.b16 %v766
    %v1085 = vunpack.c.l.b16 %v767
    %v1086 = vunpack.c.h.b16 %v767
    %v1087 = vunpack.c.l.b16 %v768
    %v1088 = vunpack.c.h.b16 %v768
    %v1089 = vunpack.c.l.b16 %v769
    %v1090 = vunpack.c.h.b16 %v769
    %v1091 = vunpack.c.l.b16 %v770
    %v1092 = vunpack.c.h.b16 %v770
    %v1093 = vunpack.c.l.b16 %v771
    %v1094 = vunpack.c.h.b16 %v771
    %v1095 = vunpack.c.l.b16 %v772
    %v1096 = vunpack.c.h.b16 %v772
    %v1097 = vunpack.c.l.b16 %v773
    %v1098 = vunpack.c.h.b16 %v773
    %v1099 = vunpack.c.l.b16 %v774
    %v1100 = vunpack.c.h.b16 %v774
    %v1101 = vunpack.c.l.b16 %v775
    %v1102 = vunpack.c.h.b16 %v775
    %v1103 = vunpack.c.l.b16 %v776
    %v1104 = vunpack.c.h.b16 %v776
    %v1105 = vunpack.c.l.b16 %v777
    %v1106 = vunpack.c.h.b16 %v777
    %v1107 = vunpack.c.l.b16 %v778
    %v1108 = vunpack.c.h.b16 %v778
    %v1109 = vunpack.c.l.b16 %v779
    %v1110 = vunpack.c.h.b16 %v779
    %v1111 = vunpack.c.l.b16 %v780
    %v1112 = vunpack.c.h.b16 %v780
    %v1113 = vunpack.c.l.b16 %v781
    %v1114 = vunpack.c.h.b16 %v781
    %v1115 = vunpack.c.l.b16 %v782
    %v1116 = vunpack.c.h.b16 %v782
    %v1117 = vunpack.c.l.b16 %v783
    %v1118 = vunpack.c.h.b16 %v783
    %v1119 = vunpack.c.l.b16 %v784
    %v1120 = vunpack.c.h.b16 %v784
    %v1121 = vunpack.c.l.b16 %v785
    %v1122 = vunpack.c.h.b16 %v785
    %v1123 = vunpack.c.l.b16 %v786
    %v1124 = vunpack.c.h.b16 %v786
    %v1125 = vunpack.c.l.b16 %v787
    %v1126 = vunpack.c.h.b16 %v787
    %v1127 = vunpack.c.l.b16 %v788
    %v1128 = vunpack.c.h.b16 %v788
    %v1129 = vunpack.c.l.b16 %v789
    %v1130 = vunpack.c.h.b16 %v789
    %v1131 = vunpack.c.l.b16 %v790
    %v1132 = vunpack.c.h.b16 %v790
    %v1133 = vunpack.c.l.b16 %v791
    %v1134 = vunpack.c.h.b16 %v791
    %v1135 = vunpack.c.l.b16 %v792
    %v1136 = vunpack.c.h.b16 %v792
    %v1137 = vunpack.c.l.b16 %v793
    %v1138 = vunpack.c.h.b16 %v793
    %v1139 = vunpack.c.l.b16 %v794
    %v1140 = vunpack.c.h.b16 %v794
    %v1141 = vunpack.c.l.b16 %v795
    %v1142 = vunpack.c.h.b16 %v795
    %v1143 = vunpack.c.l.b16 %v796
    %v1144 = vunpack.c.h.b16 %v796
    %v1145 = vunpack.c.l.b16 %v797
    %v1146 = vunpack.c.h.b16 %v797
    %v1147 = vunpack.c.l.b16 %v798
    %v1148 = vunpack.c.h.b16 %v798
    %v1149 = vunpack.c.l.b16 %v799
    %v1150 = vunpack.c.h.b16 %v799
    %v1151 = vunpack.c.l.b16 %v800
    %v1152 = vunpack.c.h.b16 %v800
    %v1153 = vunpack.c.l.b16 %v801
    %v1154 = vunpack.c.h.b16 %v801
    %v1155 = vunpack.c.l.b16 %v802
    %v1156 = vunpack.c.h.b16 %v802
    %v1157 = vunpack.c.l.b16 %v803
    %v1158 = vunpack.c.h.b16 %v803
    %v1159 = vunpack.c.l.b16 %v804
    %v1160 = vunpack.c.h.b16 %v804
    %v1161 = vunpack.c.l.b16 %v805
    %v1162 = vunpack.c.h.b16 %v805
    %v1163 = vunpack.c.l.b16 %v806
    %v1164 = vunpack.c.h.b16 %v806
    %v1165 = vunpack.c.l.b16 %v807
    %v1166 = vunpack.c.h.b16 %v807
    %v1167 = vunpack.c.l.b16 %v808
    %v1168 = vunpack.c.h.b16 %v808
    %v1169 = vunpack.c.l.b16 %v809
    %v1170 = vunpack.c.h.b16 %v809
    %v1171 = vunpack.c.l.b16 %v810
    %v1172 = vunpack.c.h.b16 %v810
    %v1173 = vunpack.c.l.b16 %v811
    %v1174 = vunpack.c.h.b16 %v811
    %v1175 = vunpack.c.l.b16 %v812
    %v1176 = vunpack.c.h.b16 %v812
    %v1177 = vunpack.c.l.b16 %v813
    %v1178 = vunpack.c.h.b16 %v813
    %v1179 = vunpack.c.l.b16 %v814
    %v1180 = vunpack.c.h.b16 %v814
    %v1181 = vunpack.c.l.b16 %v815
    %v1182 = vunpack.c.h.b16 %v815
    %v1183 = vunpack.c.l.b16 %v816
    %v1184 = vunpack.c.h.b16 %v816
    %v1185 = vunpack.c.l.b16 %v817
    %v1186 = vunpack.c.h.b16 %v817
    %v1187 = vunpack.c.l.b16 %v818
    %v1188 = vunpack.c.h.b16 %v818
    %v1189 = vunpack.c.l.b16 %v819
    %v1190 = vunpack.c.h.b16 %v819
    %v1191 = vunpack.c.l.b16 %v820
    %v1192 = vunpack.c.h.b16 %v820
    %v1193 = vunpack.c.l.b16 %v821
    %v1194 = vunpack.c.h.b16 %v821
    %v1195 = vunpack.c.l.b16 %v822
    %v1196 = vunpack.c.h.b16 %v822
    %v1197 = vunpack.c.l.b16 %v823
    %v1198 = vunpack.c.h.b16 %v823
    %v1199 = vunpack.c.l.b16 %v824
    %v1200 = vunpack.c.h.b16 %v824
    %v1201 = vunpack.c.l.b16 %v825
    %v1202 = vunpack.c.h.b16 %v825
    %v1203 = vunpack.c.l.b16 %v826
    %v1204 = vunpack.c.h.b16 %v826
    %v1205 = vunpack.c.l.b16 %v827
    %v1206 = vunpack.c.h.b16 %v827
    %v1207 = vunpack.c.l.b16 %v828
    %v1208 = vunpack.c.h.b16 %v828
    %v1209 = vunpack.c.l.b16 %v829
    %v1210 = vunpack.c.h.b16 %v829
    %v1211 = vunpack.c.l.b16 %v830
    %v1212 = vunpack.c.h.b16 %v830
    %v1213 = vunpack.c.l.b16 %v831
    %v1214 = vunpack.c.h.b16 %v831
    %v1215 = vunpack.c.l.b16 %v832
    %v1216 = vunpack.c.h.b16 %v832
    %v1217 = vunpack.c.l.b16 %v833
    %v1218 = vunpack.c.h.b16 %v833
    %v1219 = vunpack.c.l.b16 %v834
    %v1220 = vunpack.c.h.b16 %v834
    %v1221 = vunpack.c.l.b16 %v835
    %v1222 = vunpack.c.h.b16 %v835
    %v1223 = vunpack.c.l.b16 %v836
    %v1224 = vunpack.c.h.b16 %v836
    %v1225 = vunpack.c.l.b16 %v837
    %v1226 = vunpack.c.h.b16 %v837
    %v1227 = vunpack.c.l.b16 %v838
    %v1228 = vunpack.c.h.b16 %v838
    %v1229 = vunpack.c.l.b16 %v839
    %v1230 = vunpack.c.h.b16 %v839
    %v1231 = vunpack.c.l.b16 %v840
    %v1232 = vunpack.c.h.b16 %v840
    %v1233 = vunpack.c.l.b16 %v841
    %v1234 = vunpack.c.h.b16 %v841
    %v1235 = vunpack.c.l.b16 %v842
    %v1236 = vunpack.c.h.b16 %v842
    %v1237 = vunpack.c.l.b16 %v843
    %v1238 = vunpack.c.h.b16 %v843
    %v1239 = vunpack.c.l.b16 %v844
    %v1240 = vunpack.c.h.b16 %v844
    %v1241 = vunpack.c.l.b16 %v845
    %v1242 = vunpack.c.h.b16 %v845
    %v1243 = vunpack.c.l.b16 %v846
    %v1244 = vunpack.c.h.b16 %v846
    %v1245 = vunpack.c.l.b16 %v847
    %v1246 = vunpack.c.h.b16 %v847
    %v1247 = vunpack.c.l.b16 %v848
    %v1248 = vunpack.c.h.b16 %v848
    %v1249 = vpack.c.b16 %v997, %v993
    %v1250 = vpack.c.b16 %v998, %v994
    %v1251 = vpack.c.b16 %v999, %v995
    %v1252 = vpack.c.b16 %v1000, %v996
    %v1253 = vpack.c.b16 %v1005, %v1001
    %v1254 = vpack.c.b16 %v1006, %v1002
    %v1255 = vpack.c.b16 %v1007, %v1003
    %v1256 = vpack.c.b16 %v1008, %v1004
    %v1257 = vpack.c.b16 %v1013, %v1009
    %v1258 = vpack.c.b16 %v1014, %v1010
    %v1259 = vpack.c.b16 %v1015, %v1011
    %v1260 = vpack.c.b16 %v1016, %v1012
    %v1261 = vpack.c.b16 %v1021, %v1017
    %v1262 = vpack.c.b16 %v1022, %v1018
    %v1263 = vpack.c.b16 %v1023, %v1019
    %v1264 = vpack.c.b16 %v1024, %v1020
    %v1265 = vpack.c.b16 %v1029, %v1025
    %v1266 = vpack.c.b16 %v1030, %v1026
    %v1267 = vpack.c.b16 %v1031, %v1027
    %v1268 = vpack.c.b16 %v1032, %v1028
    %v1269 = vpack.c.b16 %v1037, %v1033
    %v1270 = vpack.c.b16 %v1038, %v1034
    %v1271 = vpack.c.b16 %v1039, %v1035
    %v1272 = vpack.c.b16 %v1040, %v1036
    %v1273 = vpack.c.b16 %v1045, %v1041
    %v1274 = vpack.c.b16 %v1046, %v1042
    %v1275 = vpack.c.b16 %v1047, %v1043
    %v1276 = vpack.c.b16 %v1048, %v1044
    %v1277 = vpack.c.b16 %v1053, %v1049
    %v1278 = vpack.c.b16 %v1054, %v1050
    %v1279 = vpack.c.b16 %v1055, %v1051
    %v1280 = vpack.c.b16 %v1056, %v1052
    %v1281 = vpack.c.b16 %v1061, %v1057
    %v1282 = vpack.c.b16 %v1062, %v1058
    %v1283 = vpack.c.b16 %v1063, %v1059
    %v1284 = vpack.c.b16 %v1064, %v1060
    %v1285 = vpack.c.b16 %v1069, %v1065
    %v1286 = vpack.c.b16 %v1070, %v1066
    %v1287 = vpack.c.b16 %v1071, %v1067
    %v1288 = vpack.c.b16 %v1072, %v1068
    %v1289 = vpack.c.b16 %v1077, %v1073
    %v1290 = vpack.c.b16 %v1078, %v1074
    %v1291 = vpack.c.b16 %v1079, %v1075
    %v1292 = vpack.c.b16 %v1080, %v1076
    %v1293 = vpack.c.b16 %v1085, %v1081
    %v1294 = vpack.c.b16 %v1086, %v1082
    %v1295 = vpack.c.b16 %v1087, %v1083
    %v1296 = vpack.c.b16 %v1088, %v1084
    %v1297 = vpack.c.b16 %v1093, %v1089
    %v1298 = vpack.c.b16 %v1094, %v1090
    %v1299 = vpack.c.b16 %v1095, %v1091
    %v1300 = vpack.c.b16 %v1096, %v1092
    %v1301 = vpack.c.b16 %v1101, %v1097
    %v1302 = vpack.c.b16 %v1102, %v1098
    %v1303 = vpack.c.b16 %v1103, %v1099
    %v1304 = vpack.c.b16 %v1104, %v1100
    %v1305 = vpack.c.b16 %v1109, %v1105
    %v1306 = vpack.c.b16 %v1110, %v1106
    %v1307 = vpack.c.b16 %v1111, %v1107
    %v1308 = vpack.c.b16 %v1112, %v1108
    %v1309 = vpack.c.b16 %v1117, %v1113
    %v1310 = vpack.c.b16 %v1118, %v1114
    %v1311 = vpack.c.b16 %v1119, %v1115
    %v1312 = vpack.c.b16 %v1120, %v1116
    %v1313 = vpack.c.b16 %v1125, %v1121
    %v1314 = vpack.c.b16 %v1126, %v1122
    %v1315 = vpack.c.b16 %v1127, %v1123
    %v1316 = vpack.c.b16 %v1128, %v1124
    %v1317 = vpack.c.b16 %v1133, %v1129
    %v1318 = vpack.c.b16 %v1134, %v1130
    %v1319 = vpack.c.b16 %v1135, %v1131
    %v1320 = vpack.c.b16 %v1136, %v1132
    %v1321 = vpack.c.b16 %v1141, %v1137
    %v1322 = vpack.c.b16 %v1142, %v1138
    %v1323 = vpack.c.b16 %v1143, %v1139
    %v1324 = vpack.c.b16 %v1144, %v1140
    %v1325 = vpack.c.b16 %v1149, %v1145
    %v1326 = vpack.c.b16 %v1150, %v1146
    %v1327 = vpack.c.b16 %v1151, %v1147
    %v1328 = vpack.c.b16 %v1152, %v1148
    %v1329 = vpack.c.b16 %v1157, %v1153
    %v1330 = vpack.c.b16 %v1158, %v1154
    %v1331 = vpack.c.b16 %v1159, %v1155
    %v1332 = vpack.c.b16 %v1160, %v1156
    %v1333 = vpack.c.b16 %v1165, %v1161
    %v1334 = vpack.c.b16 %v1166, %v1162
    %v1335 = vpack.c.b16 %v1167, %v1163
    %v1336 = vpack.c.b16 %v1168, %v1164
    %v1337 = vpack.c.b16 %v1173, %v1169
    %v1338 = vpack.c.b16 %v1174, %v1170
    %v1339 = vpack.c.b16 %v1175, %v1171
    %v1340 = vpack.c.b16 %v1176, %v1172
    %v1341 = vpack.c.b16 %v1181, %v1177
    %v1342 = vpack.c.b16 %v1182, %v1178
    %v1343 = vpack.c.b16 %v1183, %v1179
    %v1344 = vpack.c.b16 %v1184, %v1180
    %v1345 = vpack.c.b16 %v1189, %v1185
    %v1346 = vpack.c.b16 %v1190, %v1186
    %v1347 = vpack.c.b16 %v1191, %v1187
    %v1348 = vpack.c.b16 %v1192, %v1188
    %v1349 = vpack.c.b16 %v1197, %v1193
    %v1350 = vpack.c.b16 %v1198, %v1194
    %v1351 = vpack.c.b16 %v1199, %v1195
    %v1352 = vpack.c.b16 %v1200, %v1196
    %v1353 = vpack.c.b16 %v1205, %v1201
    %v1354 = vpack.c.b16 %v1206, %v1202
    %v1355 = vpack.c.b16 %v1207, %v1203
    %v1356 = vpack.c.b16 %v1208, %v1204
    %v1357 = vpack.c.b16 %v1213, %v1209
    %v1358 = vpack.c.b16 %v1214, %v1210
    %v1359 = vpack.c.b16 %v1215, %v1211
    %v1360 = vpack.c.b16 %v1216, %v1212
    %v1361 = vpack.c.b16 %v1221, %v1217
    %v1362 = vpack.c.b16 %v1222, %v1218
    %v1363 = vpack.c.b16 %v1223, %v1219
    %v1364 = vpack.c.b16 %v1224, %v1220
    %v1365 = vpack.c.b16 %v1229, %v1225
    %v1366 = vpack.c.b16 %v1230, %v1226
    %v1367 = vpack.c.b16 %v1231, %v1227
    %v1368 = vpack.c.b16 %v1232, %v1228
    %v1369 = vpack.c.b16 %v1237, %v1233
    %v1370 = vpack.c.b16 %v1238, %v1234
    %v1371 = vpack.c.b16 %v1239, %v1235
    %v1372 = vpack.c.b16 %v1240, %v1236
    %v1373 = vpack.c.b16 %v1245, %v1241
    %v1374 = vpack.c.b16 %v1246, %v1242
    %v1375 = vpack.c.b16 %v1247, %v1243
    %v1376 = vpack.c.b16 %v1248, %v1244
    %1505 = vmatprep.subr.bf16.mxu0 %v1250
    %1506 = vmatpush1.bf16.msra.mxu0 %v1249
    %1507 = vmatprep.subr.bf16.mxu0 %v1254
    %1508 = vmatpush1.bf16.msra.mxu0 %v1253
    %1509 = vmatprep.subr.bf16.mxu0 %v1258
    %1510 = vmatpush1.bf16.msra.mxu0 %v1257
    %1511 = vmatprep.subr.bf16.mxu0 %v1262
    %1512 = vmatpush1.bf16.msra.mxu0 %v1261
    %1513 = vmatprep.subr.bf16.mxu0 %v1266
    %1514 = vmatpush1.bf16.msra.mxu0 %v1265
    %1515 = vmatprep.subr.bf16.mxu0 %v1270
    %1516 = vmatpush1.bf16.msra.mxu0 %v1269
    %1517 = vmatprep.subr.bf16.mxu0 %v1274
    %1518 = vmatpush1.bf16.msra.mxu0 %v1273
    %1519 = vmatprep.subr.bf16.mxu0 %v1278
    %1520 = vmatpush1.bf16.msra.mxu0 %v1277
    %1521 = vmatprep.subr.bf16.mxu0 %v1282
    %1522 = vmatpush1.bf16.msra.mxu0 %v1281
    %1523 = vmatprep.subr.bf16.mxu0 %v1286
    %1524 = vmatpush1.bf16.msra.mxu0 %v1285
    %1525 = vmatprep.subr.bf16.mxu0 %v1290
    %1526 = vmatpush1.bf16.msra.mxu0 %v1289
    %1527 = vmatprep.subr.bf16.mxu0 %v1294
    %1528 = vmatpush1.bf16.msra.mxu0 %v1293
    %1529 = vmatprep.subr.bf16.mxu0 %v1298
    %1530 = vmatpush1.bf16.msra.mxu0 %v1297
    %1531 = vmatprep.subr.bf16.mxu0 %v1302
    %1532 = vmatpush1.bf16.msra.mxu0 %v1301
    %1533 = vmatprep.subr.bf16.mxu0 %v1306
    %1534 = vmatpush1.bf16.msra.mxu0 %v1305
    %1535 = vmatprep.subr.bf16.mxu0 %v1310
    %1536 = vmatpush1.bf16.msra.mxu0 %v1309
    %1537 = vmatprep.mubr.bf16.mxu0 %v718
    %1538 = vmatmul.mubr.bf16.gmra.mrb[0].mxu0 %v717
    %v1539 = vpop.f32.mrb[0].mxu0
    %v1540 = vadd.f32 %v852, %v1539
    %v1541 = vpop.f32.mrb[0].mxu0
    %v1542 = vadd.f32 %v856, %v1541
    %v1543 = vpop.f32.mrb[0].mxu0
    %v1544 = vadd.f32 %v852, %v1543
    %v1545 = vpop.f32.mrb[0].mxu0
    %v1546 = vadd.f32 %v856, %v1545
    %1547 = vdwg.mxu0
    %1548 = vmatprep.subr.bf16.mxu0 %v1314
    %1549 = vmatpush1.bf16.msra.mxu0 %v1313
    %1550 = vmatprep.subr.bf16.mxu0 %v1318
    %1551 = vmatpush1.bf16.msra.mxu0 %v1317
    %1552 = vmatprep.subr.bf16.mxu0 %v1322
    %1553 = vmatpush1.bf16.msra.mxu0 %v1321
    %1554 = vmatprep.subr.bf16.mxu0 %v1326
    %1555 = vmatpush1.bf16.msra.mxu0 %v1325
    %1556 = vmatprep.subr.bf16.mxu0 %v1330
    %1557 = vmatpush1.bf16.msra.mxu0 %v1329
    %1558 = vmatprep.subr.bf16.mxu0 %v1334
    %1559 = vmatpush1.bf16.msra.mxu0 %v1333
    %1560 = vmatprep.subr.bf16.mxu0 %v1338
    %1561 = vmatpush1.bf16.msra.mxu0 %v1337
    %1562 = vmatprep.subr.bf16.mxu0 %v1342
    %1563 = vmatpush1.bf16.msra.mxu0 %v1341
    %1564 = vmatprep.subr.bf16.mxu0 %v1346
    %1565 = vmatpush1.bf16.msra.mxu0 %v1345
    %1566 = vmatprep.subr.bf16.mxu0 %v1350
    %1567 = vmatpush1.bf16.msra.mxu0 %v1349
    %1568 = vmatprep.subr.bf16.mxu0 %v1354
    %1569 = vmatpush1.bf16.msra.mxu0 %v1353
    %1570 = vmatprep.subr.bf16.mxu0 %v1358
    %1571 = vmatpush1.bf16.msra.mxu0 %v1357
    %1572 = vmatprep.subr.bf16.mxu0 %v1362
    %1573 = vmatpush1.bf16.msra.mxu0 %v1361
    %1574 = vmatprep.subr.bf16.mxu0 %v1366
    %1575 = vmatpush1.bf16.msra.mxu0 %v1365
    %1576 = vmatprep.subr.bf16.mxu0 %v1370
    %1577 = vmatpush1.bf16.msra.mxu0 %v1369
    %1578 = vmatprep.subr.bf16.mxu0 %v1374
    %1579 = vmatpush1.bf16.msra.mxu0 %v1373
    %1580 = vmatprep.mubr.bf16.mxu0 %v720
    %1581 = vmatmul.mubr.bf16.gmra.mrb[0].mxu0 %v719
    %v1582 = vpop.f32.mrb[0].mxu0
    %v1583 = vadd.f32 %v1540, %v1582
    %v1584 = vpop.f32.mrb[0].mxu0
    %v1585 = vadd.f32 %v1542, %v1584
    %v1586 = vpop.f32.mrb[0].mxu0
    %v1587 = vadd.f32 %v1544, %v1586
    %v1588 = vpop.f32.mrb[0].mxu0
    %v1589 = vadd.f32 %v1546, %v1588
    %1590 = vdwg.mxu0
    %1591 = vmatprep.subr.bf16.mxu0 %v1252
    %1592 = vmatpush1.bf16.msra.mxu0 %v1251
    %1593 = vmatprep.subr.bf16.mxu0 %v1256
    %1594 = vmatpush1.bf16.msra.mxu0 %v1255
    %1595 = vmatprep.subr.bf16.mxu0 %v1260
    %1596 = vmatpush1.bf16.msra.mxu0 %v1259
    %1597 = vmatprep.subr.bf16.mxu0 %v1264
    %1598 = vmatpush1.bf16.msra.mxu0 %v1263
    %1599 = vmatprep.subr.bf16.mxu0 %v1268
    %1600 = vmatpush1.bf16.msra.mxu0 %v1267
    %1601 = vmatprep.subr.bf16.mxu0 %v1272
    %1602 = vmatpush1.bf16.msra.mxu0 %v1271
    %1603 = vmatprep.subr.bf16.mxu0 %v1276
    %1604 = vmatpush1.bf16.msra.mxu0 %v1275
    %1605 = vmatprep.subr.bf16.mxu0 %v1280
    %1606 = vmatpush1.bf16.msra.mxu0 %v1279
    %1607 = vmatprep.subr.bf16.mxu0 %v1284
    %1608 = vmatpush1.bf16.msra.mxu0 %v1283
    %1609 = vmatprep.subr.bf16.mxu0 %v1288
    %1610 = vmatpush1.bf16.msra.mxu0 %v1287
    %1611 = vmatprep.subr.bf16.mxu0 %v1292
    %1612 = vmatpush1.bf16.msra.mxu0 %v1291
    %1613 = vmatprep.subr.bf16.mxu0 %v1296
    %1614 = vmatpush1.bf16.msra.mxu0 %v1295
    %1615 = vmatprep.subr.bf16.mxu0 %v1300
    %1616 = vmatpush1.bf16.msra.mxu0 %v1299
    %1617 = vmatprep.subr.bf16.mxu0 %v1304
    %1618 = vmatpush1.bf16.msra.mxu0 %v1303
    %1619 = vmatprep.subr.bf16.mxu0 %v1308
    %1620 = vmatpush1.bf16.msra.mxu0 %v1307
    %1621 = vmatprep.subr.bf16.mxu0 %v1312
    %1622 = vmatpush1.bf16.msra.mxu0 %v1311
    %1623 = vmatprep.mubr.bf16.mxu0 %v718
    %1624 = vmatmul.mubr.bf16.gmra.mrb[0].mxu0 %v717
    %v1625 = vpop.f32.mrb[0].mxu0
    %v1626 = vadd.f32 %v860, %v1625
    %v1627 = vpop.f32.mrb[0].mxu0
    %v1628 = vadd.f32 %v864, %v1627
    %v1629 = vpop.f32.mrb[0].mxu0
    %v1630 = vadd.f32 %v860, %v1629
    %v1631 = vpop.f32.mrb[0].mxu0
    %v1632 = vadd.f32 %v864, %v1631
    %1633 = vdwg.mxu0
    %1634 = vmatprep.subr.bf16.mxu0 %v1316
    %1635 = vmatpush1.bf16.msra.mxu0 %v1315
    %1636 = vmatprep.subr.bf16.mxu0 %v1320
    %1637 = vmatpush1.bf16.msra.mxu0 %v1319
    %1638 = vmatprep.subr.bf16.mxu0 %v1324
    %1639 = vmatpush1.bf16.msra.mxu0 %v1323
    %1640 = vmatprep.subr.bf16.mxu0 %v1328
    %1641 = vmatpush1.bf16.msra.mxu0 %v1327
    %1642 = vmatprep.subr.bf16.mxu0 %v1332
    %1643 = vmatpush1.bf16.msra.mxu0 %v1331
    %1644 = vmatprep.subr.bf16.mxu0 %v1336
    %1645 = vmatpush1.bf16.msra.mxu0 %v1335
    %1646 = vmatprep.subr.bf16.mxu0 %v1340
    %1647 = vmatpush1.bf16.msra.mxu0 %v1339
    %1648 = vmatprep.subr.bf16.mxu0 %v1344
    %1649 = vmatpush1.bf16.msra.mxu0 %v1343
    %1650 = vmatprep.subr.bf16.mxu0 %v1348
    %1651 = vmatpush1.bf16.msra.mxu0 %v1347
    %1652 = vmatprep.subr.bf16.mxu0 %v1352
    %1653 = vmatpush1.bf16.msra.mxu0 %v1351
    %1654 = vmatprep.subr.bf16.mxu0 %v1356
    %1655 = vmatpush1.bf16.msra.mxu0 %v1355
    %1656 = vmatprep.subr.bf16.mxu0 %v1360
    %1657 = vmatpush1.bf16.msra.mxu0 %v1359
    %1658 = vmatprep.subr.bf16.mxu0 %v1364
    %1659 = vmatpush1.bf16.msra.mxu0 %v1363
    %1660 = vmatprep.subr.bf16.mxu0 %v1368
    %1661 = vmatpush1.bf16.msra.mxu0 %v1367
    %1662 = vmatprep.subr.bf16.mxu0 %v1372
    %1663 = vmatpush1.bf16.msra.mxu0 %v1371
    %1664 = vmatprep.subr.bf16.mxu0 %v1376
    %1665 = vmatpush1.bf16.msra.mxu0 %v1375
    %1666 = vmatprep.mubr.bf16.mxu0 %v720
    %1667 = vmatmul.mubr.bf16.gmra.mrb[0].mxu0 %v719
    %v1668 = vpop.f32.mrb[0].mxu0
    %v1669 = vadd.f32 %v1626, %v1668
    %v1670 = vpop.f32.mrb[0].mxu0
    %v1671 = vadd.f32 %v1628, %v1670
    %v1672 = vpop.f32.mrb[0].mxu0
    %v1673 = vadd.f32 %v1630, %v1672
    %v1674 = vpop.f32.mrb[0].mxu0
    %v1675 = vadd.f32 %v1632, %v1674
    %1676 = vdwg.mxu0
    %v1677 = vmax.f32 %v1583, 0.0
    %v1678 = vmax.f32 %v1585, 0.0
    %v1679 = vmax.f32 %v1669, 0.0
    %v1680 = vmax.f32 %v1671, 0.0
    %v1681 = vmax.f32 %v1587, 0.0
    %v1682 = vmax.f32 %v1589, 0.0
    %v1683 = vmax.f32 %v1673, 0.0
    %v1684 = vmax.f32 %v1675, 0.0
    %v1685 = vpack.c.bf16 %v1681, %v1677
    %v1686 = vpack.c.bf16 %v1682, %v1678
    %v1687 = vpack.c.bf16 %v1683, %v1679
    %v1688 = vpack.c.bf16 %v1684, %v1680
    %v1689 = vld [vmem:[#allocation10] sm:$0xf]
    %v1690 = vld [vmem:[#allocation10 + $0x4] sm:$0xf]
    %v1691 = vld [vmem:[#allocation10 + $0x8] sm:$0xf]
    %v1692 = vld [vmem:[#allocation10 + $0xc] sm:$0xf]
    %v1693 = vld [vmem:[#allocation10 + $0x10] sm:$0xf]
    %v1694 = vld [vmem:[#allocation10 + $0x14] sm:$0xf]
    %v1695 = vld [vmem:[#allocation10 + $0x18] sm:$0xf]
    %v1696 = vld [vmem:[#allocation10 + $0x1c] sm:$0xf]
    %v1697 = vld [vmem:[#allocation10 + $0x20] sm:$0xf]
    %v1698 = vld [vmem:[#allocation10 + $0x24] sm:$0xf]
    %v1699 = vld [vmem:[#allocation10 + $0x28] sm:$0xf]
    %v1700 = vld [vmem:[#allocation10 + $0x2c] sm:$0xf]
    %v1701 = vld [vmem:[#allocation10 + $0x30] sm:$0xf]
    %v1702 = vld [vmem:[#allocation10 + $0x34] sm:$0xf]
    %v1703 = vld [vmem:[#allocation10 + $0x38] sm:$0xf]
    %v1704 = vld [vmem:[#allocation10 + $0x3c] sm:$0xf]
    %v1705 = vld [vmem:[#allocation10 + $0x40] sm:$0xf]
    %v1706 = vld [vmem:[#allocation10 + $0x44] sm:$0xf]
    %v1707 = vld [vmem:[#allocation10 + $0x48] sm:$0xf]
    %v1708 = vld [vmem:[#allocation10 + $0x4c] sm:$0xf]
    %v1709 = vld [vmem:[#allocation10 + $0x50] sm:$0xf]
    %v1710 = vld [vmem:[#allocation10 + $0x54] sm:$0xf]
    %v1711 = vld [vmem:[#allocation10 + $0x58] sm:$0xf]
    %v1712 = vld [vmem:[#allocation10 + $0x5c] sm:$0xf]
    %v1713 = vld [vmem:[#allocation10 + $0x60] sm:$0xf]
    %v1714 = vld [vmem:[#allocation10 + $0x64] sm:$0xf]
    %v1715 = vld [vmem:[#allocation10 + $0x68] sm:$0xf]
    %v1716 = vld [vmem:[#allocation10 + $0x6c] sm:$0xf]
    %v1717 = vld [vmem:[#allocation10 + $0x70] sm:$0xf]
    %v1718 = vld [vmem:[#allocation10 + $0x74] sm:$0xf]
    %v1719 = vld [vmem:[#allocation10 + $0x78] sm:$0xf]
    %v1720 = vld [vmem:[#allocation10 + $0x7c] sm:$0xf]
    %v1721 = vld [vmem:[#allocation10 + $0x80] sm:$0xf]
    %v1722 = vld [vmem:[#allocation10 + $0x84] sm:$0xf]
    %v1723 = vld [vmem:[#allocation10 + $0x88] sm:$0xf]
    %v1724 = vld [vmem:[#allocation10 + $0x8c] sm:$0xf]
    %v1725 = vld [vmem:[#allocation10 + $0x90] sm:$0xf]
    %v1726 = vld [vmem:[#allocation10 + $0x94] sm:$0xf]
    %v1727 = vld [vmem:[#allocation10 + $0x98] sm:$0xf]
    %v1728 = vld [vmem:[#allocation10 + $0x9c] sm:$0xf]
    %v1729 = vld [vmem:[#allocation10 + $0xa0] sm:$0xf]
    %v1730 = vld [vmem:[#allocation10 + $0xa4] sm:$0xf]
    %v1731 = vld [vmem:[#allocation10 + $0xa8] sm:$0xf]
    %v1732 = vld [vmem:[#allocation10 + $0xac] sm:$0xf]
    %v1733 = vld [vmem:[#allocation10 + $0xb0] sm:$0xf]
    %v1734 = vld [vmem:[#allocation10 + $0xb4] sm:$0xf]
    %v1735 = vld [vmem:[#allocation10 + $0xb8] sm:$0xf]
    %v1736 = vld [vmem:[#allocation10 + $0xbc] sm:$0xf]
    %v1737 = vld [vmem:[#allocation10 + $0xc0] sm:$0xf]
    %v1738 = vld [vmem:[#allocation10 + $0xc4] sm:$0xf]
    %v1739 = vld [vmem:[#allocation10 + $0xc8] sm:$0xf]
    %v1740 = vld [vmem:[#allocation10 + $0xcc] sm:$0xf]
    %v1741 = vld [vmem:[#allocation10 + $0xd0] sm:$0xf]
    %v1742 = vld [vmem:[#allocation10 + $0xd4] sm:$0xf]
    %v1743 = vld [vmem:[#allocation10 + $0xd8] sm:$0xf]
    %v1744 = vld [vmem:[#allocation10 + $0xdc] sm:$0xf]
    %v1745 = vld [vmem:[#allocation10 + $0xe0] sm:$0xf]
    %v1746 = vld [vmem:[#allocation10 + $0xe4] sm:$0xf]
    %v1747 = vld [vmem:[#allocation10 + $0xe8] sm:$0xf]
    %v1748 = vld [vmem:[#allocation10 + $0xec] sm:$0xf]
    %v1749 = vld [vmem:[#allocation10 + $0xf0] sm:$0xf]
    %v1750 = vld [vmem:[#allocation10 + $0xf4] sm:$0xf]
    %v1751 = vld [vmem:[#allocation10 + $0xf8] sm:$0xf]
    %v1752 = vld [vmem:[#allocation10 + $0xfc] sm:$0xf]
    %v1753 = vlaneseq
    %v1754 = vshrl.u32 %v1753, 7
    %v1755 = vsub.s32 5, %v1754
    %v1756 = vrot.slane %v97, %v1755
    %v1821 = vunpack.c.l.b16 %v1689
    %v1822 = vunpack.c.l.b16 %v1690
    %v1823 = vunpack.c.l.b16 %v1691
    %v1824 = vunpack.c.l.b16 %v1692
    %v1825 = vunpack.c.l.b16 %v1693
    %v1826 = vunpack.c.l.b16 %v1694
    %v1827 = vunpack.c.l.b16 %v1695
    %v1828 = vunpack.c.l.b16 %v1696
    %v1829 = vunpack.c.l.b16 %v1697
    %v1830 = vunpack.c.l.b16 %v1698
    %v1831 = vunpack.c.l.b16 %v1699
    %v1832 = vunpack.c.l.b16 %v1700
    %v1833 = vunpack.c.l.b16 %v1701
    %v1834 = vunpack.c.l.b16 %v1702
    %v1835 = vunpack.c.l.b16 %v1703
    %v1836 = vunpack.c.l.b16 %v1704
    %v1837 = vunpack.c.l.b16 %v1705
    %v1838 = vunpack.c.l.b16 %v1706
    %v1839 = vunpack.c.l.b16 %v1707
    %v1840 = vunpack.c.l.b16 %v1708
    %v1841 = vunpack.c.l.b16 %v1709
    %v1842 = vunpack.c.l.b16 %v1710
    %v1843 = vunpack.c.l.b16 %v1711
    %v1844 = vunpack.c.l.b16 %v1712
    %v1845 = vunpack.c.l.b16 %v1713
    %v1846 = vunpack.c.l.b16 %v1714
    %v1847 = vunpack.c.l.b16 %v1715
    %v1848 = vunpack.c.l.b16 %v1716
    %v1849 = vunpack.c.l.b16 %v1717
    %v1850 = vunpack.c.l.b16 %v1718
    %v1851 = vunpack.c.l.b16 %v1719
    %v1852 = vunpack.c.l.b16 %v1720
    %v1853 = vunpack.c.l.b16 %v1721
    %v1854 = vunpack.c.l.b16 %v1722
    %v1855 = vunpack.c.l.b16 %v1723
    %v1856 = vunpack.c.l.b16 %v1724
    %v1857 = vunpack.c.l.b16 %v1725
    %v1858 = vunpack.c.l.b16 %v1726
    %v1859 = vunpack.c.l.b16 %v1727
    %v1860 = vunpack.c.l.b16 %v1728
    %v1861 = vunpack.c.l.b16 %v1729
    %v1862 = vunpack.c.l.b16 %v1730
    %v1863 = vunpack.c.l.b16 %v1731
    %v1864 = vunpack.c.l.b16 %v1732
    %v1865 = vunpack.c.l.b16 %v1733
    %v1866 = vunpack.c.l.b16 %v1734
    %v1867 = vunpack.c.l.b16 %v1735
    %v1868 = vunpack.c.l.b16 %v1736
    %v1869 = vunpack.c.l.b16 %v1737
    %v1870 = vunpack.c.l.b16 %v1738
    %v1871 = vunpack.c.l.b16 %v1739
    %v1872 = vunpack.c.l.b16 %v1740
    %v1873 = vunpack.c.l.b16 %v1741
    %v1874 = vunpack.c.l.b16 %v1742
    %v1875 = vunpack.c.l.b16 %v1743
    %v1876 = vunpack.c.l.b16 %v1744
    %v1877 = vunpack.c.l.b16 %v1745
    %v1878 = vunpack.c.l.b16 %v1746
    %v1879 = vunpack.c.l.b16 %v1747
    %v1880 = vunpack.c.l.b16 %v1748
    %v1881 = vunpack.c.l.b16 %v1749
    %v1882 = vunpack.c.l.b16 %v1750
    %v1883 = vunpack.c.l.b16 %v1751
    %v1884 = vunpack.c.l.b16 %v1752
    %v1885 = vpack.c.b16 %v1822, %v1821
    %v1886 = vpack.c.b16 %v1824, %v1823
    %v1887 = vpack.c.b16 %v1826, %v1825
    %v1888 = vpack.c.b16 %v1828, %v1827
    %v1889 = vpack.c.b16 %v1830, %v1829
    %v1890 = vpack.c.b16 %v1832, %v1831
    %v1891 = vpack.c.b16 %v1834, %v1833
    %v1892 = vpack.c.b16 %v1836, %v1835
    %v1893 = vpack.c.b16 %v1838, %v1837
    %v1894 = vpack.c.b16 %v1840, %v1839
    %v1895 = vpack.c.b16 %v1842, %v1841
    %v1896 = vpack.c.b16 %v1844, %v1843
    %v1897 = vpack.c.b16 %v1846, %v1845
    %v1898 = vpack.c.b16 %v1848, %v1847
    %v1899 = vpack.c.b16 %v1850, %v1849
    %v1900 = vpack.c.b16 %v1852, %v1851
    %v1901 = vpack.c.b16 %v1854, %v1853
    %v1902 = vpack.c.b16 %v1856, %v1855
    %v1903 = vpack.c.b16 %v1858, %v1857
    %v1904 = vpack.c.b16 %v1860, %v1859
    %v1905 = vpack.c.b16 %v1862, %v1861
    %v1906 = vpack.c.b16 %v1864, %v1863
    %v1907 = vpack.c.b16 %v1866, %v1865
    %v1908 = vpack.c.b16 %v1868, %v1867
    %v1909 = vpack.c.b16 %v1870, %v1869
    %v1910 = vpack.c.b16 %v1872, %v1871
    %v1911 = vpack.c.b16 %v1874, %v1873
    %v1912 = vpack.c.b16 %v1876, %v1875
    %v1913 = vpack.c.b16 %v1878, %v1877
    %v1914 = vpack.c.b16 %v1880, %v1879
    %v1915 = vpack.c.b16 %v1882, %v1881
    %v1916 = vpack.c.b16 %v1884, %v1883
    %1949 = vmatprep.subr.bf16.mxu0 0
    %1950 = vmatpush1.bf16.msra.mxu0 %v1885
    %1951 = vmatprep.subr.bf16.mxu0 0
    %1952 = vmatpush1.bf16.msra.mxu0 %v1886
    %1953 = vmatprep.subr.bf16.mxu0 0
    %1954 = vmatpush1.bf16.msra.mxu0 %v1887
    %1955 = vmatprep.subr.bf16.mxu0 0
    %1956 = vmatpush1.bf16.msra.mxu0 %v1888
    %1957 = vmatprep.subr.bf16.mxu0 0
    %1958 = vmatpush1.bf16.msra.mxu0 %v1889
    %1959 = vmatprep.subr.bf16.mxu0 0
    %1960 = vmatpush1.bf16.msra.mxu0 %v1890
    %1961 = vmatprep.subr.bf16.mxu0 0
    %1962 = vmatpush1.bf16.msra.mxu0 %v1891
    %1963 = vmatprep.subr.bf16.mxu0 0
    %1964 = vmatpush1.bf16.msra.mxu0 %v1892
    %1965 = vmatprep.subr.bf16.mxu0 0
    %1966 = vmatpush1.bf16.msra.mxu0 %v1893
    %1967 = vmatprep.subr.bf16.mxu0 0
    %1968 = vmatpush1.bf16.msra.mxu0 %v1894
    %1969 = vmatprep.subr.bf16.mxu0 0
    %1970 = vmatpush1.bf16.msra.mxu0 %v1895
    %1971 = vmatprep.subr.bf16.mxu0 0
    %1972 = vmatpush1.bf16.msra.mxu0 %v1896
    %1973 = vmatprep.subr.bf16.mxu0 0
    %1974 = vmatpush1.bf16.msra.mxu0 %v1897
    %1975 = vmatprep.subr.bf16.mxu0 0
    %1976 = vmatpush1.bf16.msra.mxu0 %v1898
    %1977 = vmatprep.subr.bf16.mxu0 0
    %1978 = vmatpush1.bf16.msra.mxu0 %v1899
    %1979 = vmatprep.subr.bf16.mxu0 0
    %1980 = vmatpush1.bf16.msra.mxu0 %v1900
    %1981 = vmatprep.mubr.bf16.mxu0 %v1686
    %1982 = vmatmul.mubr.bf16.gmra.mrb[0].mxu0 %v1685
    %v1983 = vpop.f32.mrb[0].mxu0
    %v1984 = vadd.f32 %v1756, %v1983
    %v1985 = vpop.f32.mrb[0].mxu0
    %v1986 = vpop.f32.mrb[0].mxu0
    %v1987 = vadd.f32 %v1756, %v1986
    %v1988 = vpop.f32.mrb[0].mxu0
    %1989 = vdwg.mxu0
    %1990 = vmatprep.subr.bf16.mxu0 0
    %1991 = vmatpush1.bf16.msra.mxu0 %v1901
    %1992 = vmatprep.subr.bf16.mxu0 0
    %1993 = vmatpush1.bf16.msra.mxu0 %v1902
    %1994 = vmatprep.subr.bf16.mxu0 0
    %1995 = vmatpush1.bf16.msra.mxu0 %v1903
    %1996 = vmatprep.subr.bf16.mxu0 0
    %1997 = vmatpush1.bf16.msra.mxu0 %v1904
    %1998 = vmatprep.subr.bf16.mxu0 0
    %1999 = vmatpush1.bf16.msra.mxu0 %v1905
    %2000 = vmatprep.subr.bf16.mxu0 0
    %2001 = vmatpush1.bf16.msra.mxu0 %v1906
    %2002 = vmatprep.subr.bf16.mxu0 0
    %2003 = vmatpush1.bf16.msra.mxu0 %v1907
    %2004 = vmatprep.subr.bf16.mxu0 0
    %2005 = vmatpush1.bf16.msra.mxu0 %v1908
    %2006 = vmatprep.subr.bf16.mxu0 0
    %2007 = vmatpush1.bf16.msra.mxu0 %v1909
    %2008 = vmatprep.subr.bf16.mxu0 0
    %2009 = vmatpush1.bf16.msra.mxu0 %v1910
    %2010 = vmatprep.subr.bf16.mxu0 0
    %2011 = vmatpush1.bf16.msra.mxu0 %v1911
    %2012 = vmatprep.subr.bf16.mxu0 0
    %2013 = vmatpush1.bf16.msra.mxu0 %v1912
    %2014 = vmatprep.subr.bf16.mxu0 0
    %2015 = vmatpush1.bf16.msra.mxu0 %v1913
    %2016 = vmatprep.subr.bf16.mxu0 0
    %2017 = vmatpush1.bf16.msra.mxu0 %v1914
    %2018 = vmatprep.subr.bf16.mxu0 0
    %2019 = vmatpush1.bf16.msra.mxu0 %v1915
    %2020 = vmatprep.subr.bf16.mxu0 0
    %2021 = vmatpush1.bf16.msra.mxu0 %v1916
    %2022 = vmatprep.mubr.bf16.mxu0 %v1688
    %2023 = vmatmul.mubr.bf16.gmra.mrb[0].mxu0 %v1687
    %v2024 = vpop.f32.mrb[0].mxu0
    %v2025 = vadd.f32 %v1984, %v2024
    %v2026 = vpop.f32.mrb[0].mxu0
    %v2027 = vpop.f32.mrb[0].mxu0
    %v2028 = vadd.f32 %v1987, %v2027
    %v2029 = vpop.f32.mrb[0].mxu0
    %2030 = vdwg.mxu0
    %2031 = vst [vmem:[#allocation11] sm:$0xff] %v2025
    %2032 = vst [vmem:[#allocation11 + $0x8] sm:$0xff] %v2028
    // Predicated region
    $region54: #{diffusion_classifier_forward.1} parent=1 // pred_check
      _
    $region55: #{diffusion_classifier_forward.1} parent=1 // pred_check_branch
      %2034 = sbr.rel (0) target = $region57
    $region56: #{diffusion_classifier_forward.1} parent=1 // pred_region
      %s2036 = ssub.s32 256, 256
      %2037 = vsyncadd [#allocation4], %s2036
      %s2038 = sshll.u32 [#allocation11], 4
      %s2039 = int_to_ptr.vmem [resolvable:$true] %s2038
      %2044 = dma.vmem_to_hbm [thread:$0]  %s2039, 256, %s8, [#allocation4], 128, 128, 8
    $region57: #{diffusion_classifier_forward.1} parent=1 // pred_fallthru
      _
    // Predicated region
    $region58: #{diffusion_classifier_forward.1} parent=1 // pred_check
      _
    $region59: #{diffusion_classifier_forward.1} parent=1 // pred_check_branch
      %2046 = sbr.rel (0) target = $region61
    $region60: #{diffusion_classifier_forward.1} parent=1 // pred_region
      %2047 = dma.done [#allocation4], 256
    $region61: #{diffusion_classifier_forward.1} parent=1 // pred_fallthru
      _
    %2048 = vsyncpa [#allocation3], 1
    %2049 = vsyncpa [#allocation6], 1
    %2050 = vsyncpa [#allocation9], 1
    %2051 = vsyncpa [#allocation4], 1

</llo_original>
